<compile_context>
chip_gen: v7x
topology: tpu7x:2x2x1
jax: 0.10.0
libtpu: 0.0.40
codegen_flags: <defaults>
</compile_context>

<pallas_src>
import functools

import jax
import jax.numpy as jnp
from jax import lax
from jax.experimental import pallas as pl
from jax.experimental.pallas import tpu as pltpu

NEG_SLOPE = 0.01      # nn.LeakyReLU(negative_slope=0.01)
BN_EPS = 1e-5         # nn.BatchNorm2d default eps
IM2COL_MAX_C = 128    # im2col (K = 9*C) up to C=128 keeps the MXU fed


# ----------------------------------------------------------------------------
# Fused kernel: BN1+LReLU -> conv3x3(stride s) -> BN2+LReLU -> conv3x3(s=1)
#               -> + shortcut (identity x, or in-VMEM 1x1/stride-s projection)
# ----------------------------------------------------------------------------
def _resnet_block_kernel(*refs, H, W, Ho, Wo, cin, cout, stride,
                         has_sc, use_col1, use_col2):
    it = iter(refs)
    x_ref, w1_ref, s1_ref, b1_ref, s2_ref, b2_ref, w2_ref = (
        next(it), next(it), next(it), next(it), next(it), next(it), next(it))
    wsc_ref = next(it) if has_sc else None
    o_ref = next(it)
    ap_ref, hp_ref = next(it), next(it)
    col1_ref = next(it) if use_col1 else None
    col2_ref = next(it) if use_col2 else None

    def zero_halo(ref, h, w, c):
        # Only the 1-pixel halo must be zero; the interior is fully rewritten
        # below. Zeroing just the 4 strips (instead of the whole (h+2)(w+2)c
        # buffer every step, as before) removes a full store pass AND stays
        # correct when the "parallel" batch axis is sharded across TensorCores
        # (each core has a private scratch, so a one-shot pl.when(pid==0)
        # clear would miss the second core).
        z_row = jnp.zeros((1, w + 2, c), ref.dtype)
        ref[0:1, :, :] = z_row
        ref[h + 1:h + 2, :, :] = z_row
        z_col = jnp.zeros((h, 1, c), ref.dtype)
        ref[1:h + 1, 0:1, :] = z_col
        ref[1:h + 1, w + 1:w + 2, :] = z_col

    zero_halo(ap_ref, H, W, cin)
    zero_halo(hp_ref, Ho, Wo, cout)

    # ---- fused BN1 + LeakyReLU prologue (f32 elementwise) --------------------
    x = x_ref[0].astype(jnp.float32)                        # (H, W, cin)
    a = x * s1_ref[0] + b1_ref[0]
    a = jnp.where(a >= 0, a, NEG_SLOPE * a)
    ap_ref[1:H + 1, 1:W + 1, :] = a.astype(ap_ref.dtype)    # in-VMEM zero pad

    # ---- conv1: 3x3, stride applied in-kernel via strided window loads -------
    def tap1(kh, kw):
        if stride == 1:
            p = ap_ref[kh:kh + Ho, kw:kw + Wo, :]
        else:
            # TODO(synk): if vld becomes the bottleneck at large C, replace the
            #             doubly-strided loads with a one-time space-to-depth.
            p = ap_ref[pl.ds(kh, Ho, stride=stride),
                       pl.ds(kw, Wo, stride=stride), :]
        return p.reshape(Ho * Wo, cin)

    if use_col1:
        # im2col staged through VMEM (no jnp.concatenate lane-repack in vregs);
        # a single K = 9*cin matmul keeps the MXU systolic array filled.
        for kh in range(3):
            for kw in range(3):
                t = kh * 3 + kw
                col1_ref[:, t * cin:(t + 1) * cin] = tap1(kh, kw)
        acc1 = jnp.dot(col1_ref[...], w1_ref[...],
                       preferred_element_type=jnp.float32)
    else:
        # Large cin: nine K = cin (>=128) matmuls, no im2col copy needed.
        acc1 = jnp.zeros((Ho * Wo, cout), jnp.float32)
        for kh in range(3):
            for kw in range(3):
                t = kh * 3 + kw
                acc1 = acc1 + jnp.dot(tap1(kh, kw),
                                      w1_ref[t * cin:(t + 1) * cin, :],
                                      preferred_element_type=jnp.float32)

    # ---- fused BN2 + LeakyReLU (f32) -----------------------------------------
    z = acc1 * s2_ref[0] + b2_ref[0]
    z = jnp.where(z >= 0, z, NEG_SLOPE * z)
    # TODO(synk): dropout > 0 (training mode) not implemented — eval() forward.
    hp_ref[1:Ho + 1, 1:Wo + 1, :] = z.reshape(Ho, Wo, cout).astype(hp_ref.dtype)

    # ---- conv2: 3x3, stride 1 (h1 never leaves VMEM) --------------------------
    def tap2(kh, kw):
        return hp_ref[kh:kh + Ho, kw:kw + Wo, :].reshape(Ho * Wo, cout)

    if use_col2:
        for kh in range(3):
            for kw in range(3):
                t = kh * 3 + kw
                col2_ref[:, t * cout:(t + 1) * cout] = tap2(kh, kw)
        acc2 = jnp.dot(col2_ref[...], w2_ref[...],
                       preferred_element_type=jnp.float32)
    else:
        acc2 = jnp.zeros((Ho * Wo, cout), jnp.float32)
        for kh in range(3):
            for kw in range(3):
                t = kh * 3 + kw
                acc2 = acc2 + jnp.dot(tap2(kh, kw),
                                      w2_ref[t * cout:(t + 1) * cout, :],
                                      preferred_element_type=jnp.float32)

    # ---- residual add (shortcut never touches HBM) ----------------------------
    y = acc2.reshape(Ho, Wo, cout)
    if has_sc:
        # 1x1 / stride-s projection conv on the BN1 activation = center tap.
        sc = jnp.dot(tap1(1, 1), wsc_ref[...], preferred_element_type=jnp.float32)
        y = y + sc.reshape(Ho, Wo, cout)
    else:
        y = y + x                       # identity shortcut: original input x
    o_ref[0] = y.astype(o_ref.dtype)


# ----------------------------------------------------------------------------
# Module wrappers
# ----------------------------------------------------------------------------
def _bn_affine(gamma, beta, mean, var):
    scale = gamma / jnp.sqrt(var + BN_EPS)
    return scale, beta - mean * scale


def _conv_out(n, stride):
    return (n - 1) // stride + 1          # kernel=3, padding=1


def _vmem_limit_bytes(required):
    try:
        cap = int(getattr(pltpu.get_tpu_info(), "vmem_capacity_bytes", 128 << 20))
    except Exception:
        cap = 128 << 20
    # Never exceed 3/4 of physical VMEM (leaves Mosaic-internal headroom, and
    # scales correctly for v7x's 64 MiB); never ask for less than 48 MiB.
    return int(min(cap * 3 // 4, max(48 << 20, 3 * required)))


def resnet_block_forward_nhwc(x_nhwc, params, *, stride,
                              matmul_dtype=jnp.float32):
    """Fused Pallas forward of ResnetBlock (eval mode, dropout=0), NHWC layout.

    matmul_dtype=jnp.bfloat16 stages MXU operands (padded activations + conv
    weights) in bf16 with f32 accumulation — recommended on v5e/v6e/v7x; the
    BN/LeakyReLU epilogues stay in f32.
    """
    x = x_nhwc.astype(jnp.float32)
    N, H, W, Cin = x.shape
    w1 = params["conv1_w"]                 # (3,3,Cin,Cout) HWIO
    w2 = params["conv2_w"]                 # (3,3,Cout,Cout) HWIO
    Cout = w1.shape[-1]
    in_is_out = (Cin == Cout)
    has_sc = not in_is_out
    if in_is_out:
        assert stride == 1, "identity shortcut requires stride == 1 (as in the PyTorch module)"
    Ho, Wo = _conv_out(H, stride), _conv_out(W, stride)

    mm = matmul_dtype
    mm_item = jnp.dtype(mm).itemsize
    w1_mat = jnp.asarray(w1, jnp.float32).reshape(9 * Cin, Cout).astype(mm)
    w2_mat = jnp.asarray(w2, jnp.float32).reshape(9 * Cout, Cout).astype(mm)
    s1, b1 = _bn_affine(params["bn1_gamma"], params["bn1_beta"],
                        params["bn1_mean"], params["bn1_var"])
    s2, b2 = _bn_affine(params["bn2_gamma"], params["bn2_beta"],
                        params["bn2_mean"], params["bn2_var"])

    use_col1 = Cin <= IM2COL_MAX_C
    use_col2 = Cout <= IM2COL_MAX_C

    # VMEM budget: double-buffered blocks + persistent scratch.
    blk_bytes = 2 * (H * W * Cin * 4 + Ho * Wo * Cout * 4
                     + (9 * Cin + 9 * Cout + (Cin if has_sc else 0)) * Cout * mm_item
                     + 2 * (Cin + Cout) * 4)
    scr_bytes = ((H + 2) * (W + 2) * Cin + (Ho + 2) * (Wo + 2) * Cout) * mm_item
    if use_col1:
        scr_bytes += Ho * Wo * 9 * Cin * mm_item
    if use_col2:
        scr_bytes += Ho * Wo * 9 * Cout * mm_item

    cparams = pltpu.CompilerParams(
        dimension_semantics=("parallel",),
        vmem_limit_bytes=_vmem_limit_bytes(blk_bytes + scr_bytes))

    flops = N * (2 * Ho * Wo * 9 * Cin * Cout
                 + 2 * Ho * Wo * 9 * Cout * Cout
                 + (2 * Ho * Wo * Cin * Cout if has_sc else 0)
                 + 4 * H * W * Cin + 4 * Ho * Wo * Cout)
    bytes_accessed = (N * (H * W * Cin + Ho * Wo * Cout) * 4
                      + (9 * Cin + 9 * Cout + Cin) * Cout * mm_item
                      + 2 * (Cin + Cout) * 4)
    cost = pl.CostEstimate(flops=int(flops), transcendentals=0,
                           bytes_accessed=int(bytes_accessed))

    kern = functools.partial(
        _resnet_block_kernel, H=H, W=W, Ho=Ho, Wo=Wo, cin=Cin, cout=Cout,
        stride=stride, has_sc=has_sc, use_col1=use_col1, use_col2=use_col2)

    inputs = [x, w1_mat,
              s1.reshape(1, Cin).astype(jnp.float32),
              b1.reshape(1, Cin).astype(jnp.float32),
              s2.reshape(1, Cout).astype(jnp.float32),
              b2.reshape(1, Cout).astype(jnp.float32),
              w2_mat]
    in_specs = [
        pl.BlockSpec((1, H, W, Cin), lambda n: (n, 0, 0, 0)),
        pl.BlockSpec((9 * Cin, Cout), lambda n: (0, 0)),
        pl.BlockSpec((1, Cin), lambda n: (0, 0)),
        pl.BlockSpec((1, Cin), lambda n: (0, 0)),
        pl.BlockSpec((1, Cout), lambda n: (0, 0)),
        pl.BlockSpec((1, Cout), lambda n: (0, 0)),
        pl.BlockSpec((9 * Cout, Cout), lambda n: (0, 0)),
    ]
    if has_sc:
        inputs.append(jnp.asarray(params["shortcut_w"], jnp.float32).astype(mm))
        in_specs.append(pl.BlockSpec((Cin, Cout), lambda n: (0, 0)))

    scratch_shapes = [pltpu.VMEM((H + 2, W + 2, Cin), mm),
                      pltpu.VMEM((Ho + 2, Wo + 2, Cout), mm)]
    if use_col1:
        scratch_shapes.append(pltpu.VMEM((Ho * Wo, 9 * Cin), mm))
    if use_col2:
        scratch_shapes.append(pltpu.VMEM((Ho * Wo, 9 * Cout), mm))

    return pl.pallas_call(
        kern,
        out_shape=jax.ShapeDtypeStruct((N, Ho, Wo, Cout), jnp.float32),
        grid=(N,),
        in_specs=in_specs,
        out_specs=pl.BlockSpec((1, Ho, Wo, Cout), lambda n: (n, 0, 0, 0)),
        scratch_shapes=scratch_shapes,
        compiler_params=cparams,
        cost_estimate=cost,
    )(*inputs)


def resnet_block_forward(x_nchw, params, *, stride, matmul_dtype=jnp.float32):
    """NCHW (PyTorch-parity) wrapper. For stacks of blocks, prefer calling
    resnet_block_forward_nhwc directly and keep activations channels-last to
    avoid two full-activation HBM transpose passes per block."""
    x = jnp.transpose(x_nchw, (0, 2, 3, 1))
    y = resnet_block_forward_nhwc(x, params, stride=stride,
                                  matmul_dtype=matmul_dtype)
    return jnp.transpose(y, (0, 3, 1, 2))


# ----------------------------------------------------------------------------
# Pure-JAX reference (for verification)
# ----------------------------------------------------------------------------
def reference_forward(x_nchw, params, *, stride):
    def bn(x, g, b, m, v):
        return (g[None, :, None, None] * (x - m[None, :, None, None])
                / jnp.sqrt(v[None, :, None, None] + BN_EPS)
                + b[None, :, None, None])

    def lrelu(x):
        return jnp.where(x >= 0, x, NEG_SLOPE * x)

    def conv(x, w_hwio, s, p):
        w = jnp.transpose(w_hwio, (3, 2, 0, 1))          # HWIO -> OIHW
        return lax.conv_general_dilated(
            x, w, (s, s), [(p, p), (p, p)],
            dimension_numbers=("NCHW", "OIHW", "NCHW"))

    Cin = x_nchw.shape[1]
    Cout = params["conv1_w"].shape[-1]
    a = lrelu(bn(x_nchw, params["bn1_gamma"], params["bn1_beta"],
                 params["bn1_mean"], params["bn1_var"]))
    h = conv(a, params["conv1_w"], stride, 1)
    h = lrelu(bn(h, params["bn2_gamma"], params["bn2_beta"],
                 params["bn2_mean"], params["bn2_var"]))
    out = conv(h, params["conv2_w"], 1, 1)
    if Cin == Cout:
        sc = x_nchw
    else:
        wsc = params["shortcut_w"].T[:, :, None, None]   # (Cout,Cin,1,1) OIHW
        sc = lax.conv_general_dilated(
            a, wsc, (stride, stride), [(0, 0), (0, 0)],
            dimension_numbers=("NCHW", "OIHW", "NCHW"))
    return out + sc


# ----------------------------------------------------------------------------
# Demo / self-check
# ----------------------------------------------------------------------------
def make_params(key, cin, cout):
    ks = jax.random.split(key, 13)
    f32 = jnp.float32
    return {
        "bn1_gamma": 1.0 + 0.1 * jax.random.normal(ks[0], (cin,), f32),
        "bn1_beta": 0.1 * jax.random.normal(ks[1], (cin,), f32),
        "bn1_mean": 0.1 * jax.random.normal(ks[2], (cin,), f32),
        "bn1_var": 1.0 + 0.1 * jnp.abs(jax.random.normal(ks[3], (cin,), f32)),
        "conv1_w": 0.1 * jax.random.normal(ks[4], (3, 3, cin, cout), f32),
        "bn2_gamma": 1.0 + 0.1 * jax.random.normal(ks[5], (cout,), f32),
        "bn2_beta": 0.1 * jax.random.normal(ks[6], (cout,), f32),
        "bn2_mean": 0.1 * jax.random.normal(ks[7], (cout,), f32),
        "bn2_var": 1.0 + 0.1 * jnp.abs(jax.random.normal(ks[8], (cout,), f32)),
        "conv2_w": 0.1 * jax.random.normal(ks[9], (3, 3, cout, cout), f32),
        "shortcut_w": 0.1 * jax.random.normal(ks[10], (cin, cout), f32),
    }


if __name__ == "__main__":
    key = jax.random.PRNGKey(0)
    k_p1, k_x, k_p2 = jax.random.split(key, 3)

    # Case 1: WRN stage transition — Cin != Cout, stride 2 (1x1 shortcut conv).
    N, CIN, COUT, HW, STRIDE = 2, 4, 8, 16, 2
    params = make_params(k_p1, CIN, COUT)
    x = jax.random.normal(k_x, (N, CIN, HW, HW), jnp.float32)     # NCHW, like PyTorch

    y = jax.block_until_ready(resnet_block_forward(x, params, stride=STRIDE))
    y_ref = reference_forward(x, params, stride=STRIDE)
    assert y.shape == (N, COUT, HW // STRIDE, HW // STRIDE), y.shape
    err = float(jnp.max(jnp.abs(y - y_ref)))
    assert err < 1e-3, f"f32 strided-block mismatch vs reference: {err}"

    # Case 2: identity shortcut — Cin == Cout, stride 1 (no shortcut matmul at all).
    params2 = make_params(k_p2, COUT, COUT)
    x2 = jax.random.normal(k_x, (N, COUT, HW, HW), jnp.float32)
    y2 = jax.block_until_ready(resnet_block_forward(x2, params2, stride=1))
    y2_ref = reference_forward(x2, params2, stride=1)
    assert y2.shape == (N, COUT, HW, HW), y2.shape
    err2 = float(jnp.max(jnp.abs(y2 - y2_ref)))
    assert err2 < 1e-3, f"f32 identity-block mismatch vs reference: {err2}"

    # Case 3: bf16 MXU operands (recommended on v5e/v6e/v7x), f32 accumulation.
    y3 = jax.block_until_ready(
        resnet_block_forward(x, params, stride=STRIDE, matmul_dtype=jnp.bfloat16))
    err3 = float(jnp.max(jnp.abs(y3 - y_ref)))
    assert err3 < 5e-2, f"bf16-matmul block mismatch vs reference: {err3}"

    print("KERNEL_OK")
</pallas_src>

<mosaic_0001>
module attributes {stable_mosaic.version = 11 : i64} {
  func.func @_resnet_block_kernel(%arg0: i32, %arg1: memref<1x16x16x4xf32, #tpu.memory_space<vmem>>, %arg2: memref<36x8xf32, #tpu.memory_space<vmem>>, %arg3: memref<1x4xf32, #tpu.memory_space<vmem>>, %arg4: memref<1x4xf32, #tpu.memory_space<vmem>>, %arg5: memref<1x8xf32, #tpu.memory_space<vmem>>, %arg6: memref<1x8xf32, #tpu.memory_space<vmem>>, %arg7: memref<72x8xf32, #tpu.memory_space<vmem>>, %arg8: memref<4x8xf32, #tpu.memory_space<vmem>>, %arg9: memref<1x8x8x8xf32, #tpu.memory_space<vmem>>, %arg10: memref<18x18x4xf32, #tpu.memory_space<vmem>>, %arg11: memref<10x10x8xf32, #tpu.memory_space<vmem>>, %arg12: memref<64x36xf32, #tpu.memory_space<vmem>>, %arg13: memref<64x72xf32, #tpu.memory_space<vmem>>) attributes {dimension_semantics = [#tpu.dimension_semantics<parallel>], iteration_bounds = array<i64: 2>, scalar_prefetch = 0 : i64, scratch_operands = 4 : i64, tpu.core_type = #tpu.core_type<tc>, window_params = [{transform_indices = @transform_0, window_bounds = array<i64: 1, 16, 16, 4>}, {pipeline_mode = #tpu.pipeline_mode<synchronous>, transform_indices = @transform_1, window_bounds = array<i64: 36, 8>}, {pipeline_mode = #tpu.pipeline_mode<synchronous>, transform_indices = @transform_2, window_bounds = array<i64: 1, 4>}, {pipeline_mode = #tpu.pipeline_mode<synchronous>, transform_indices = @transform_3, window_bounds = array<i64: 1, 4>}, {pipeline_mode = #tpu.pipeline_mode<synchronous>, transform_indices = @transform_4, window_bounds = array<i64: 1, 8>}, {pipeline_mode = #tpu.pipeline_mode<synchronous>, transform_indices = @transform_5, window_bounds = array<i64: 1, 8>}, {pipeline_mode = #tpu.pipeline_mode<synchronous>, transform_indices = @transform_6, window_bounds = array<i64: 72, 8>}, {pipeline_mode = #tpu.pipeline_mode<synchronous>, transform_indices = @transform_7, window_bounds = array<i64: 4, 8>}, {transform_indices = @transform_8, window_bounds = array<i64: 1, 8, 8, 8>}]} {
    %cst = arith.constant 0.000000e+00 : f32
    %0 = vector.broadcast %cst : f32 to vector<1x18x4xf32>
    %c0 = arith.constant 0 : index
    %c0_0 = arith.constant 0 : index
    %c0_1 = arith.constant 0 : index
    %1 = vector.load %arg10[%c0, %c0_0, %c0_1] : memref<18x18x4xf32, #tpu.memory_space<vmem>>, vector<1x18x4xf32>
    tpu.vector_store %arg10[%c0, %c0_0, %c0_1], %0 {strides = array<i32>} : memref<18x18x4xf32, #tpu.memory_space<vmem>>, vector<1x18x4xf32>,
    %c17 = arith.constant 17 : index
    %c0_2 = arith.constant 0 : index
    %c0_3 = arith.constant 0 : index
    %2 = vector.load %arg10[%c17, %c0_2, %c0_3] : memref<18x18x4xf32, #tpu.memory_space<vmem>>, vector<1x18x4xf32>
    tpu.vector_store %arg10[%c17, %c0_2, %c0_3], %0 {strides = array<i32>} : memref<18x18x4xf32, #tpu.memory_space<vmem>>, vector<1x18x4xf32>,
    %cst_4 = arith.constant 0.000000e+00 : f32
    %3 = vector.broadcast %cst_4 : f32 to vector<16x1x4xf32>
    %c1 = arith.constant 1 : index
    %c0_5 = arith.constant 0 : index
    %c0_6 = arith.constant 0 : index
    %4 = vector.load %arg10[%c1, %c0_5, %c0_6] : memref<18x18x4xf32, #tpu.memory_space<vmem>>, vector<16x1x4xf32>
    tpu.vector_store %arg10[%c1, %c0_5, %c0_6], %3 {strides = array<i32>} : memref<18x18x4xf32, #tpu.memory_space<vmem>>, vector<16x1x4xf32>,
    %c1_7 = arith.constant 1 : index
    %c17_8 = arith.constant 17 : index
    %c0_9 = arith.constant 0 : index
    %5 = vector.load %arg10[%c1_7, %c17_8, %c0_9] : memref<18x18x4xf32, #tpu.memory_space<vmem>>, vector<16x1x4xf32>
    tpu.vector_store %arg10[%c1_7, %c17_8, %c0_9], %3 {strides = array<i32>} : memref<18x18x4xf32, #tpu.memory_space<vmem>>, vector<16x1x4xf32>,
    %cst_10 = arith.constant 0.000000e+00 : f32
    %6 = vector.broadcast %cst_10 : f32 to vector<1x10x8xf32>
    %c0_11 = arith.constant 0 : index
    %c0_12 = arith.constant 0 : index
    %c0_13 = arith.constant 0 : index
    %7 = vector.load %arg11[%c0_11, %c0_12, %c0_13] : memref<10x10x8xf32, #tpu.memory_space<vmem>>, vector<1x10x8xf32>
    tpu.vector_store %arg11[%c0_11, %c0_12, %c0_13], %6 {strides = array<i32>} : memref<10x10x8xf32, #tpu.memory_space<vmem>>, vector<1x10x8xf32>,
    %c9 = arith.constant 9 : index
    %c0_14 = arith.constant 0 : index
    %c0_15 = arith.constant 0 : index
    %8 = vector.load %arg11[%c9, %c0_14, %c0_15] : memref<10x10x8xf32, #tpu.memory_space<vmem>>, vector<1x10x8xf32>
    tpu.vector_store %arg11[%c9, %c0_14, %c0_15], %6 {strides = array<i32>} : memref<10x10x8xf32, #tpu.memory_space<vmem>>, vector<1x10x8xf32>,
    %cst_16 = arith.constant 0.000000e+00 : f32
    %9 = vector.broadcast %cst_16 : f32 to vector<8x1x8xf32>
    %c1_17 = arith.constant 1 : index
    %c0_18 = arith.constant 0 : index
    %c0_19 = arith.constant 0 : index
    %10 = vector.load %arg11[%c1_17, %c0_18, %c0_19] : memref<10x10x8xf32, #tpu.memory_space<vmem>>, vector<8x1x8xf32>
    tpu.vector_store %arg11[%c1_17, %c0_18, %c0_19], %9 {strides = array<i32>} : memref<10x10x8xf32, #tpu.memory_space<vmem>>, vector<8x1x8xf32>,
    %c1_20 = arith.constant 1 : index
    %c9_21 = arith.constant 9 : index
    %c0_22 = arith.constant 0 : index
    %11 = vector.load %arg11[%c1_20, %c9_21, %c0_22] : memref<10x10x8xf32, #tpu.memory_space<vmem>>, vector<8x1x8xf32>
    tpu.vector_store %arg11[%c1_20, %c9_21, %c0_22], %9 {strides = array<i32>} : memref<10x10x8xf32, #tpu.memory_space<vmem>>, vector<8x1x8xf32>,
    %c0_23 = arith.constant 0 : index
    %c0_24 = arith.constant 0 : index
    %c0_25 = arith.constant 0 : index
    %c0_26 = arith.constant 0 : index
    %12 = vector.load %arg1[%c0_23, %c0_24, %c0_25, %c0_26] : memref<1x16x16x4xf32, #tpu.memory_space<vmem>>, vector<1x16x16x4xf32>
    %13 = vector.shape_cast %12 : vector<1x16x16x4xf32> to vector<16x16x4xf32>
    %c0_27 = arith.constant 0 : index
    %c0_28 = arith.constant 0 : index
    %14 = vector.load %arg3[%c0_27, %c0_28] : memref<1x4xf32, #tpu.memory_space<vmem>>, vector<1x4xf32>
    %15 = vector.shape_cast %14 : vector<1x4xf32> to vector<4xf32>
    %16 = vector.shape_cast %15 : vector<4xf32> to vector<1x1x4xf32>
    %17 = vector.broadcast %16 : vector<1x1x4xf32> to vector<16x16x4xf32>
    %18 = arith.mulf %13, %17 : vector<16x16x4xf32>
    %c0_29 = arith.constant 0 : index
    %c0_30 = arith.constant 0 : index
    %19 = vector.load %arg4[%c0_29, %c0_30] : memref<1x4xf32, #tpu.memory_space<vmem>>, vector<1x4xf32>
    %20 = vector.shape_cast %19 : vector<1x4xf32> to vector<4xf32>
    %21 = vector.shape_cast %20 : vector<4xf32> to vector<1x1x4xf32>
    %22 = vector.broadcast %21 : vector<1x1x4xf32> to vector<16x16x4xf32>
    %23 = arith.addf %18, %22 : vector<16x16x4xf32>
    %cst_31 = arith.constant 0.000000e+00 : f32
    %24 = vector.broadcast %cst_31 : f32 to vector<16x16x4xf32>
    %25 = arith.cmpf oge, %23, %24 : vector<16x16x4xf32>
    %cst_32 = arith.constant 0.00999999977 : f32
    %26 = vector.broadcast %cst_32 : f32 to vector<16x16x4xf32>
    %27 = arith.mulf %26, %23 : vector<16x16x4xf32>
    %28 = arith.select %25, %23, %27 : vector<16x16x4xi1>, vector<16x16x4xf32>
    %c1_33 = arith.constant 1 : index
    %c1_34 = arith.constant 1 : index
    %c0_35 = arith.constant 0 : index
    %29 = vector.load %arg10[%c1_33, %c1_34, %c0_35] : memref<18x18x4xf32, #tpu.memory_space<vmem>>, vector<16x16x4xf32>
    tpu.vector_store %arg10[%c1_33, %c1_34, %c0_35], %28 {strides = array<i32>} : memref<18x18x4xf32, #tpu.memory_space<vmem>>, vector<16x16x4xf32>,
    %c0_36 = arith.constant 0 : index
    %c0_37 = arith.constant 0 : index
    %c0_38 = arith.constant 0 : index
    %30 = tpu.strided_load %arg10[%c0_36, %c0_37, %c0_38] {strides = array<i32: 2, 2, 1>} : memref<18x18x4xf32, #tpu.memory_space<vmem>>, vector<8x8x4xf32>
    %31 = vector.shape_cast %30 : vector<8x8x4xf32> to vector<64x4xf32>
    %c0_39 = arith.constant 0 : index
    %c0_40 = arith.constant 0 : index
    %32 = vector.load %arg12[%c0_39, %c0_40] : memref<64x36xf32, #tpu.memory_space<vmem>>, vector<64x4xf32>
    tpu.vector_store %arg12[%c0_39, %c0_40], %31 {strides = array<i32>} : memref<64x36xf32, #tpu.memory_space<vmem>>, vector<64x4xf32>,
    %c0_41 = arith.constant 0 : index
    %c1_42 = arith.constant 1 : index
    %c0_43 = arith.constant 0 : index
    %33 = tpu.strided_load %arg10[%c0_41, %c1_42, %c0_43] {strides = array<i32: 2, 2, 1>} : memref<18x18x4xf32, #tpu.memory_space<vmem>>, vector<8x8x4xf32>
    %34 = vector.shape_cast %33 : vector<8x8x4xf32> to vector<64x4xf32>
    %c0_44 = arith.constant 0 : index
    %c4 = arith.constant 4 : index
    %35 = vector.load %arg12[%c0_44, %c4] : memref<64x36xf32, #tpu.memory_space<vmem>>, vector<64x4xf32>
    tpu.vector_store %arg12[%c0_44, %c4], %34 {strides = array<i32>} : memref<64x36xf32, #tpu.memory_space<vmem>>, vector<64x4xf32>,
    %c0_45 = arith.constant 0 : index
    %c2 = arith.constant 2 : index
    %c0_46 = arith.constant 0 : index
    %36 = tpu.strided_load %arg10[%c0_45, %c2, %c0_46] {strides = array<i32: 2, 2, 1>} : memref<18x18x4xf32, #tpu.memory_space<vmem>>, vector<8x8x4xf32>
    %37 = vector.shape_cast %36 : vector<8x8x4xf32> to vector<64x4xf32>
    %c0_47 = arith.constant 0 : index
    %c8 = arith.constant 8 : index
    %38 = vector.load %arg12[%c0_47, %c8] : memref<64x36xf32, #tpu.memory_space<vmem>>, vector<64x4xf32>
    tpu.vector_store %arg12[%c0_47, %c8], %37 {strides = array<i32>} : memref<64x36xf32, #tpu.memory_space<vmem>>, vector<64x4xf32>,
    %c1_48 = arith.constant 1 : index
    %c0_49 = arith.constant 0 : index
    %c0_50 = arith.constant 0 : index
    %39 = tpu.strided_load %arg10[%c1_48, %c0_49, %c0_50] {strides = array<i32: 2, 2, 1>} : memref<18x18x4xf32, #tpu.memory_space<vmem>>, vector<8x8x4xf32>
    %40 = vector.shape_cast %39 : vector<8x8x4xf32> to vector<64x4xf32>
    %c0_51 = arith.constant 0 : index
    %c12 = arith.constant 12 : index
    %41 = vector.load %arg12[%c0_51, %c12] : memref<64x36xf32, #tpu.memory_space<vmem>>, vector<64x4xf32>
    tpu.vector_store %arg12[%c0_51, %c12], %40 {strides = array<i32>} : memref<64x36xf32, #tpu.memory_space<vmem>>, vector<64x4xf32>,
    %c1_52 = arith.constant 1 : index
    %c1_53 = arith.constant 1 : index
    %c0_54 = arith.constant 0 : index
    %42 = tpu.strided_load %arg10[%c1_52, %c1_53, %c0_54] {strides = array<i32: 2, 2, 1>} : memref<18x18x4xf32, #tpu.memory_space<vmem>>, vector<8x8x4xf32>
    %43 = vector.shape_cast %42 : vector<8x8x4xf32> to vector<64x4xf32>
    %c0_55 = arith.constant 0 : index
    %c16 = arith.constant 16 : index
    %44 = vector.load %arg12[%c0_55, %c16] : memref<64x36xf32, #tpu.memory_space<vmem>>, vector<64x4xf32>
    tpu.vector_store %arg12[%c0_55, %c16], %43 {strides = array<i32>} : memref<64x36xf32, #tpu.memory_space<vmem>>, vector<64x4xf32>,
    %c1_56 = arith.constant 1 : index
    %c2_57 = arith.constant 2 : index
    %c0_58 = arith.constant 0 : index
    %45 = tpu.strided_load %arg10[%c1_56, %c2_57, %c0_58] {strides = array<i32: 2, 2, 1>} : memref<18x18x4xf32, #tpu.memory_space<vmem>>, vector<8x8x4xf32>
    %46 = vector.shape_cast %45 : vector<8x8x4xf32> to vector<64x4xf32>
    %c0_59 = arith.constant 0 : index
    %c20 = arith.constant 20 : index
    %47 = vector.load %arg12[%c0_59, %c20] : memref<64x36xf32, #tpu.memory_space<vmem>>, vector<64x4xf32>
    tpu.vector_store %arg12[%c0_59, %c20], %46 {strides = array<i32>} : memref<64x36xf32, #tpu.memory_space<vmem>>, vector<64x4xf32>,
    %c2_60 = arith.constant 2 : index
    %c0_61 = arith.constant 0 : index
    %c0_62 = arith.constant 0 : index
    %48 = tpu.strided_load %arg10[%c2_60, %c0_61, %c0_62] {strides = array<i32: 2, 2, 1>} : memref<18x18x4xf32, #tpu.memory_space<vmem>>, vector<8x8x4xf32>
    %49 = vector.shape_cast %48 : vector<8x8x4xf32> to vector<64x4xf32>
    %c0_63 = arith.constant 0 : index
    %c24 = arith.constant 24 : index
    %50 = vector.load %arg12[%c0_63, %c24] : memref<64x36xf32, #tpu.memory_space<vmem>>, vector<64x4xf32>
    tpu.vector_store %arg12[%c0_63, %c24], %49 {strides = array<i32>} : memref<64x36xf32, #tpu.memory_space<vmem>>, vector<64x4xf32>,
    %c2_64 = arith.constant 2 : index
    %c1_65 = arith.constant 1 : index
    %c0_66 = arith.constant 0 : index
    %51 = tpu.strided_load %arg10[%c2_64, %c1_65, %c0_66] {strides = array<i32: 2, 2, 1>} : memref<18x18x4xf32, #tpu.memory_space<vmem>>, vector<8x8x4xf32>
    %52 = vector.shape_cast %51 : vector<8x8x4xf32> to vector<64x4xf32>
    %c0_67 = arith.constant 0 : index
    %c28 = arith.constant 28 : index
    %53 = vector.load %arg12[%c0_67, %c28] : memref<64x36xf32, #tpu.memory_space<vmem>>, vector<64x4xf32>
    tpu.vector_store %arg12[%c0_67, %c28], %52 {strides = array<i32>} : memref<64x36xf32, #tpu.memory_space<vmem>>, vector<64x4xf32>,
    %c2_68 = arith.constant 2 : index
    %c2_69 = arith.constant 2 : index
    %c0_70 = arith.constant 0 : index
    %54 = tpu.strided_load %arg10[%c2_68, %c2_69, %c0_70] {strides = array<i32: 2, 2, 1>} : memref<18x18x4xf32, #tpu.memory_space<vmem>>, vector<8x8x4xf32>
    %55 = vector.shape_cast %54 : vector<8x8x4xf32> to vector<64x4xf32>
    %c0_71 = arith.constant 0 : index
    %c32 = arith.constant 32 : index
    %56 = vector.load %arg12[%c0_71, %c32] : memref<64x36xf32, #tpu.memory_space<vmem>>, vector<64x4xf32>
    tpu.vector_store %arg12[%c0_71, %c32], %55 {strides = array<i32>} : memref<64x36xf32, #tpu.memory_space<vmem>>, vector<64x4xf32>,
    %c0_72 = arith.constant 0 : index
    %c0_73 = arith.constant 0 : index
    %57 = vector.load %arg12[%c0_72, %c0_73] : memref<64x36xf32, #tpu.memory_space<vmem>>, vector<64x36xf32>
    %c0_74 = arith.constant 0 : index
    %c0_75 = arith.constant 0 : index
    %58 = vector.load %arg2[%c0_74, %c0_75] : memref<36x8xf32, #tpu.memory_space<vmem>>, vector<36x8xf32>
    %cst_76 = arith.constant dense<0.000000e+00> : vector<64x8xf32>
    %59 = tpu.matmul %57, %58, %cst_76 {dimension_numbers = #tpu.dot_dimension_numbers<[1], [0], [0], [1], [0, 0, 1, 1], [], []>} : vector<64x36xf32>, vector<36x8xf32>, vector<64x8xf32> -> vector<64x8xf32>
    %c0_77 = arith.constant 0 : index
    %c0_78 = arith.constant 0 : index
    %60 = vector.load %arg5[%c0_77, %c0_78] : memref<1x8xf32, #tpu.memory_space<vmem>>, vector<1x8xf32>
    %61 = vector.shape_cast %60 : vector<1x8xf32> to vector<8xf32>
    %62 = vector.shape_cast %61 : vector<8xf32> to vector<1x8xf32>
    %63 = vector.broadcast %62 : vector<1x8xf32> to vector<64x8xf32>
    %64 = arith.mulf %59, %63 : vector<64x8xf32>
    %c0_79 = arith.constant 0 : index
    %c0_80 = arith.constant 0 : index
    %65 = vector.load %arg6[%c0_79, %c0_80] : memref<1x8xf32, #tpu.memory_space<vmem>>, vector<1x8xf32>
    %66 = vector.shape_cast %65 : vector<1x8xf32> to vector<8xf32>
    %67 = vector.shape_cast %66 : vector<8xf32> to vector<1x8xf32>
    %68 = vector.broadcast %67 : vector<1x8xf32> to vector<64x8xf32>
    %69 = arith.addf %64, %68 : vector<64x8xf32>
    %cst_81 = arith.constant 0.000000e+00 : f32
    %70 = vector.broadcast %cst_81 : f32 to vector<64x8xf32>
    %71 = arith.cmpf oge, %69, %70 : vector<64x8xf32>
    %cst_82 = arith.constant 0.00999999977 : f32
    %72 = vector.broadcast %cst_82 : f32 to vector<64x8xf32>
    %73 = arith.mulf %72, %69 : vector<64x8xf32>
    %74 = arith.select %71, %69, %73 : vector<64x8xi1>, vector<64x8xf32>
    %75 = vector.shape_cast %74 : vector<64x8xf32> to vector<8x8x8xf32>
    %c1_83 = arith.constant 1 : index
    %c1_84 = arith.constant 1 : index
    %c0_85 = arith.constant 0 : index
    %76 = vector.load %arg11[%c1_83, %c1_84, %c0_85] : memref<10x10x8xf32, #tpu.memory_space<vmem>>, vector<8x8x8xf32>
    tpu.vector_store %arg11[%c1_83, %c1_84, %c0_85], %75 {strides = array<i32>} : memref<10x10x8xf32, #tpu.memory_space<vmem>>, vector<8x8x8xf32>,
    %c0_86 = arith.constant 0 : index
    %c0_87 = arith.constant 0 : index
    %c0_88 = arith.constant 0 : index
    %77 = vector.load %arg11[%c0_86, %c0_87, %c0_88] : memref<10x10x8xf32, #tpu.memory_space<vmem>>, vector<8x8x8xf32>
    %78 = vector.shape_cast %77 : vector<8x8x8xf32> to vector<64x8xf32>
    %c0_89 = arith.constant 0 : index
    %c0_90 = arith.constant 0 : index
    %79 = vector.load %arg13[%c0_89, %c0_90] : memref<64x72xf32, #tpu.memory_space<vmem>>, vector<64x8xf32>
    tpu.vector_store %arg13[%c0_89, %c0_90], %78 {strides = array<i32>} : memref<64x72xf32, #tpu.memory_space<vmem>>, vector<64x8xf32>,
    %c0_91 = arith.constant 0 : index
    %c1_92 = arith.constant 1 : index
    %c0_93 = arith.constant 0 : index
    %80 = vector.load %arg11[%c0_91, %c1_92, %c0_93] : memref<10x10x8xf32, #tpu.memory_space<vmem>>, vector<8x8x8xf32>
    %81 = vector.shape_cast %80 : vector<8x8x8xf32> to vector<64x8xf32>
    %c0_94 = arith.constant 0 : index
    %c8_95 = arith.constant 8 : index
    %82 = vector.load %arg13[%c0_94, %c8_95] : memref<64x72xf32, #tpu.memory_space<vmem>>, vector<64x8xf32>
    tpu.vector_store %arg13[%c0_94, %c8_95], %81 {strides = array<i32>} : memref<64x72xf32, #tpu.memory_space<vmem>>, vector<64x8xf32>,
    %c0_96 = arith.constant 0 : index
    %c2_97 = arith.constant 2 : index
    %c0_98 = arith.constant 0 : index
    %83 = vector.load %arg11[%c0_96, %c2_97, %c0_98] : memref<10x10x8xf32, #tpu.memory_space<vmem>>, vector<8x8x8xf32>
    %84 = vector.shape_cast %83 : vector<8x8x8xf32> to vector<64x8xf32>
    %c0_99 = arith.constant 0 : index
    %c16_100 = arith.constant 16 : index
    %85 = vector.load %arg13[%c0_99, %c16_100] : memref<64x72xf32, #tpu.memory_space<vmem>>, vector<64x8xf32>
    tpu.vector_store %arg13[%c0_99, %c16_100], %84 {strides = array<i32>} : memref<64x72xf32, #tpu.memory_space<vmem>>, vector<64x8xf32>,
    %c1_101 = arith.constant 1 : index
    %c0_102 = arith.constant 0 : index
    %c0_103 = arith.constant 0 : index
    %86 = vector.load %arg11[%c1_101, %c0_102, %c0_103] : memref<10x10x8xf32, #tpu.memory_space<vmem>>, vector<8x8x8xf32>
    %87 = vector.shape_cast %86 : vector<8x8x8xf32> to vector<64x8xf32>
    %c0_104 = arith.constant 0 : index
    %c24_105 = arith.constant 24 : index
    %88 = vector.load %arg13[%c0_104, %c24_105] : memref<64x72xf32, #tpu.memory_space<vmem>>, vector<64x8xf32>
    tpu.vector_store %arg13[%c0_104, %c24_105], %87 {strides = array<i32>} : memref<64x72xf32, #tpu.memory_space<vmem>>, vector<64x8xf32>,
    %c1_106 = arith.constant 1 : index
    %c1_107 = arith.constant 1 : index
    %c0_108 = arith.constant 0 : index
    %89 = vector.load %arg11[%c1_106, %c1_107, %c0_108] : memref<10x10x8xf32, #tpu.memory_space<vmem>>, vector<8x8x8xf32>
    %90 = vector.shape_cast %89 : vector<8x8x8xf32> to vector<64x8xf32>
    %c0_109 = arith.constant 0 : index
    %c32_110 = arith.constant 32 : index
    %91 = vector.load %arg13[%c0_109, %c32_110] : memref<64x72xf32, #tpu.memory_space<vmem>>, vector<64x8xf32>
    tpu.vector_store %arg13[%c0_109, %c32_110], %90 {strides = array<i32>} : memref<64x72xf32, #tpu.memory_space<vmem>>, vector<64x8xf32>,
    %c1_111 = arith.constant 1 : index
    %c2_112 = arith.constant 2 : index
    %c0_113 = arith.constant 0 : index
    %92 = vector.load %arg11[%c1_111, %c2_112, %c0_113] : memref<10x10x8xf32, #tpu.memory_space<vmem>>, vector<8x8x8xf32>
    %93 = vector.shape_cast %92 : vector<8x8x8xf32> to vector<64x8xf32>
    %c0_114 = arith.constant 0 : index
    %c40 = arith.constant 40 : index
    %94 = vector.load %arg13[%c0_114, %c40] : memref<64x72xf32, #tpu.memory_space<vmem>>, vector<64x8xf32>
    tpu.vector_store %arg13[%c0_114, %c40], %93 {strides = array<i32>} : memref<64x72xf32, #tpu.memory_space<vmem>>, vector<64x8xf32>,
    %c2_115 = arith.constant 2 : index
    %c0_116 = arith.constant 0 : index
    %c0_117 = arith.constant 0 : index
    %95 = vector.load %arg11[%c2_115, %c0_116, %c0_117] : memref<10x10x8xf32, #tpu.memory_space<vmem>>, vector<8x8x8xf32>
    %96 = vector.shape_cast %95 : vector<8x8x8xf32> to vector<64x8xf32>
    %c0_118 = arith.constant 0 : index
    %c48 = arith.constant 48 : index
    %97 = vector.load %arg13[%c0_118, %c48] : memref<64x72xf32, #tpu.memory_space<vmem>>, vector<64x8xf32>
    tpu.vector_store %arg13[%c0_118, %c48], %96 {strides = array<i32>} : memref<64x72xf32, #tpu.memory_space<vmem>>, vector<64x8xf32>,
    %c2_119 = arith.constant 2 : index
    %c1_120 = arith.constant 1 : index
    %c0_121 = arith.constant 0 : index
    %98 = vector.load %arg11[%c2_119, %c1_120, %c0_121] : memref<10x10x8xf32, #tpu.memory_space<vmem>>, vector<8x8x8xf32>
    %99 = vector.shape_cast %98 : vector<8x8x8xf32> to vector<64x8xf32>
    %c0_122 = arith.constant 0 : index
    %c56 = arith.constant 56 : index
    %100 = vector.load %arg13[%c0_122, %c56] : memref<64x72xf32, #tpu.memory_space<vmem>>, vector<64x8xf32>
    tpu.vector_store %arg13[%c0_122, %c56], %99 {strides = array<i32>} : memref<64x72xf32, #tpu.memory_space<vmem>>, vector<64x8xf32>,
    %c2_123 = arith.constant 2 : index
    %c2_124 = arith.constant 2 : index
    %c0_125 = arith.constant 0 : index
    %101 = vector.load %arg11[%c2_123, %c2_124, %c0_125] : memref<10x10x8xf32, #tpu.memory_space<vmem>>, vector<8x8x8xf32>
    %102 = vector.shape_cast %101 : vector<8x8x8xf32> to vector<64x8xf32>
    %c0_126 = arith.constant 0 : index
    %c64 = arith.constant 64 : index
    %103 = vector.load %arg13[%c0_126, %c64] : memref<64x72xf32, #tpu.memory_space<vmem>>, vector<64x8xf32>
    tpu.vector_store %arg13[%c0_126, %c64], %102 {strides = array<i32>} : memref<64x72xf32, #tpu.memory_space<vmem>>, vector<64x8xf32>,
    %c0_127 = arith.constant 0 : index
    %c0_128 = arith.constant 0 : index
    %104 = vector.load %arg13[%c0_127, %c0_128] : memref<64x72xf32, #tpu.memory_space<vmem>>, vector<64x72xf32>
    %c0_129 = arith.constant 0 : index
    %c0_130 = arith.constant 0 : index
    %105 = vector.load %arg7[%c0_129, %c0_130] : memref<72x8xf32, #tpu.memory_space<vmem>>, vector<72x8xf32>
    %cst_131 = arith.constant dense<0.000000e+00> : vector<64x8xf32>
    %106 = tpu.matmul %104, %105, %cst_131 {dimension_numbers = #tpu.dot_dimension_numbers<[1], [0], [0], [1], [0, 0, 1, 1], [], []>} : vector<64x72xf32>, vector<72x8xf32>, vector<64x8xf32> -> vector<64x8xf32>
    %107 = vector.shape_cast %106 : vector<64x8xf32> to vector<8x8x8xf32>
    %c1_132 = arith.constant 1 : index
    %c1_133 = arith.constant 1 : index
    %c0_134 = arith.constant 0 : index
    %108 = tpu.strided_load %arg10[%c1_132, %c1_133, %c0_134] {strides = array<i32: 2, 2, 1>} : memref<18x18x4xf32, #tpu.memory_space<vmem>>, vector<8x8x4xf32>
    %109 = vector.shape_cast %108 : vector<8x8x4xf32> to vector<64x4xf32>
    %c0_135 = arith.constant 0 : index
    %c0_136 = arith.constant 0 : index
    %110 = vector.load %arg8[%c0_135, %c0_136] : memref<4x8xf32, #tpu.memory_space<vmem>>, vector<4x8xf32>
    %cst_137 = arith.constant dense<0.000000e+00> : vector<64x8xf32>
    %111 = tpu.matmul %109, %110, %cst_137 {dimension_numbers = #tpu.dot_dimension_numbers<[1], [0], [0], [1], [0, 0, 1, 1], [], []>} : vector<64x4xf32>, vector<4x8xf32>, vector<64x8xf32> -> vector<64x8xf32>
    %112 = vector.shape_cast %111 : vector<64x8xf32> to vector<8x8x8xf32>
    %113 = arith.addf %107, %112 : vector<8x8x8xf32>
    %c0_138 = arith.constant 0 : index
    %c0_139 = arith.constant 0 : index
    %c0_140 = arith.constant 0 : index
    %c0_141 = arith.constant 0 : index
    %114 = vector.load %arg9[%c0_138, %c0_139, %c0_140, %c0_141] : memref<1x8x8x8xf32, #tpu.memory_space<vmem>>, vector<1x8x8x8xf32>
    %115 = vector.shape_cast %114 : vector<1x8x8x8xf32> to vector<8x8x8xf32>
    %116 = vector.shape_cast %113 : vector<8x8x8xf32> to vector<1x8x8x8xf32>
    tpu.vector_store %arg9[%c0_138, %c0_139, %c0_140, %c0_141], %116 {strides = array<i32>} : memref<1x8x8x8xf32, #tpu.memory_space<vmem>>, vector<1x8x8x8xf32>,
    return
  }
  func.func @transform_0(%arg0: i32) -> (i32, i32, i32, i32) {
    %c0_i32 = arith.constant 0 : i32
    %c0_i32_0 = arith.constant 0 : i32
    %c0_i32_1 = arith.constant 0 : i32
    %c0_i32_2 = arith.constant 0 : i32
    return %arg0, %c0_i32, %c0_i32_0, %c0_i32_1 : i32, i32, i32, i32
  }
  func.func @transform_1(%arg0: i32) -> (i32, i32) {
    %c0_i32 = arith.constant 0 : i32
    %c0_i32_0 = arith.constant 0 : i32
    %c0_i32_1 = arith.constant 0 : i32
    return %c0_i32, %c0_i32_0 : i32, i32
  }
  func.func @transform_2(%arg0: i32) -> (i32, i32) {
    %c0_i32 = arith.constant 0 : i32
    %c0_i32_0 = arith.constant 0 : i32
    %c0_i32_1 = arith.constant 0 : i32
    return %c0_i32, %c0_i32_0 : i32, i32
  }
  func.func @transform_3(%arg0: i32) -> (i32, i32) {
    %c0_i32 = arith.constant 0 : i32
    %c0_i32_0 = arith.constant 0 : i32
    %c0_i32_1 = arith.constant 0 : i32
    return %c0_i32, %c0_i32_0 : i32, i32
  }
  func.func @transform_4(%arg0: i32) -> (i32, i32) {
    %c0_i32 = arith.constant 0 : i32
    %c0_i32_0 = arith.constant 0 : i32
    %c0_i32_1 = arith.constant 0 : i32
    return %c0_i32, %c0_i32_0 : i32, i32
  }
  func.func @transform_5(%arg0: i32) -> (i32, i32) {
    %c0_i32 = arith.constant 0 : i32
    %c0_i32_0 = arith.constant 0 : i32
    %c0_i32_1 = arith.constant 0 : i32
    return %c0_i32, %c0_i32_0 : i32, i32
  }
  func.func @transform_6(%arg0: i32) -> (i32, i32) {
    %c0_i32 = arith.constant 0 : i32
    %c0_i32_0 = arith.constant 0 : i32
    %c0_i32_1 = arith.constant 0 : i32
    return %c0_i32, %c0_i32_0 : i32, i32
  }
  func.func @transform_7(%arg0: i32) -> (i32, i32) {
    %c0_i32 = arith.constant 0 : i32
    %c0_i32_0 = arith.constant 0 : i32
    %c0_i32_1 = arith.constant 0 : i32
    return %c0_i32, %c0_i32_0 : i32, i32
  }
  func.func @transform_8(%arg0: i32) -> (i32, i32, i32, i32) {
    %c0_i32 = arith.constant 0 : i32
    %c0_i32_0 = arith.constant 0 : i32
    %c0_i32_1 = arith.constant 0 : i32
    %c0_i32_2 = arith.constant 0 : i32
    return %arg0, %c0_i32, %c0_i32_0, %c0_i32_1 : i32, i32, i32, i32
  }
}

</mosaic_0001>

<llo_original>
// kernel: tpu_custom_call.1
$region0: #{tpu_custom_call.1}
  #allocation0 [shape = 'u32[]', space=smem, size = 0x4, offset = 0x4, fixed_abs, tag = 'smem constant byte address 0x4 - core index']
  #allocation1 [shape = 'u32[144,128]{1,0:T(1,128)}', space=vmem, size = 0x12000, scoped, tag = 'internal scratch']
  #allocation2 [shape = 'f32[18,18,4]{2,1,0:T(8,128)}', space=vmem, size = 0x36000, scoped, tag = 'scratch operand']
  #allocation3 [shape = 'f32[10,10,8]{2,1,0:T(8,128)}', space=vmem, size = 0x14000, scoped, tag = 'scratch operand']
  #allocation4 [shape = 'f32[64,36]{1,0:T(8,128)}', space=vmem, size = 0x8000, scoped, tag = 'scratch operand']
  #allocation5 [shape = 'f32[64,72]{1,0:T(8,128)}', space=vmem, size = 0x8000, scoped, tag = 'scratch operand']
  %s0 = inlined_call_operand.vmem [shape: f32[2,16,16,4], index: 0, kind: input, shape index: {}]
  %s1 = inlined_call_operand.vmem [shape: f32[36,8], index: 1, kind: input, shape index: {}]
  %s2 = inlined_call_operand.vmem [shape: f32[1,4], index: 2, kind: input, shape index: {}]
  %s3 = inlined_call_operand.vmem [shape: f32[1,4], index: 3, kind: input, shape index: {}]
  %s4 = inlined_call_operand.vmem [shape: f32[1,8], index: 4, kind: input, shape index: {}]
  %s5 = inlined_call_operand.vmem [shape: f32[1,8], index: 5, kind: input, shape index: {}]
  %s6 = inlined_call_operand.vmem [shape: f32[72,8], index: 6, kind: input, shape index: {}]
  %s7 = inlined_call_operand.vmem [shape: f32[4,8], index: 7, kind: input, shape index: {}]
  %s8 = inlined_call_operand.hbm [shape: f32[2,8,8,8], index: 8, kind: output, shape index: {}]
  %s9 = sld [smem:[#allocation0]]
  $region65: #{tpu_custom_call.1} parent=0
    _
  %s11 = ssub.s32 1, %s9
  %s12 = scalar_select 0, %s11, %s9
  $region1: #{tpu_custom_call.1} parent=0
    #allocation6 [shape = 'u8[65536]{0}', space=vmem, size = 0x10000, scoped, tag = 'output window, operand 0']
    #allocation7 [shape = 's32[2]{0}', space=sflag, size = 0x8, scoped, tag = 'scoped memory for tpu_custom_call.1']
    %13 = vsyncpa [#allocation7], 0
    %s14 = scalar_lea.sflag [#allocation7], 1
    %15 = vsyncpa %s14, 0
    loop: start=0, step=1, limit=4
    $region2: #{tpu_custom_call.1} parent=1 // loop_pre_header
      _
    $region3: #{tpu_custom_call.1} parent=1 // loop_header
      %s17 = sphi 0, %s21
      %p18 = scmp.ge.s32.totalorder %s17, 4
      %s27 = sphi 0, %s29
      %s30 = sphi 0, %s27
      %s31 = sphi 0, %s30
      %s47 = sphi 0, %s31
      %s51 = sphi 0, %s51
      %s53 = sphi 0, %s51
      %s54 = sphi 0, %s53
      %s68 = sphi 0, %s54
      %s72 = sphi 0, %s72
      %s74 = sphi 0, %s72
      %s75 = sphi 0, %s74
      %s89 = sphi 0, %s75
      %s93 = sphi 0, %s93
      %s95 = sphi 0, %s93
      %s96 = sphi 0, %s95
      %s110 = sphi 0, %s96
      %s114 = sphi 0, %s114
      %s116 = sphi 0, %s114
      %s117 = sphi 0, %s116
      %s131 = sphi 0, %s117
      %s135 = sphi 0, %s135
      %s137 = sphi 0, %s135
      %s138 = sphi 0, %s137
      %s152 = sphi 0, %s138
      %s156 = sphi 0, %s156
      %s158 = sphi 0, %s156
      %s159 = sphi 0, %s158
      %s173 = sphi 0, %s159
      %s177 = sphi 0, %s177
      %s179 = sphi 0, %s177
      %s180 = sphi 0, %s179
      %s194 = sphi 0, %s180
      %s200 = sphi 0, %s202
      %s203 = sphi 0, %s200
      %s204 = sphi 0, %s203
      %s220 = sphi 0, %s204
    $region4: #{tpu_custom_call.1} parent=1 // loop_header_branch
      %20 = sbr.rel (%p18) target = $region8
    $region5: #{tpu_custom_call.1} parent=1 // loop_body
      %s22 = ssub.s32 %s17, 1
      %s23 = ssub.s32 %s17, 2
      %s24 = sadd.s32 %s17, 1
      %s25 = ssub.s32 %s17, %s24
      %p26 = scmp.eq.s32.totalorder %s25, 0
      %s28 = sadd.s32 %s27, 1
      %s29 = scalar_select %p26, %s27, %s28
      %p32 = pneg %p26
      %p33 = scmp.eq.s32.totalorder %s17, 1
      %p34 = por %p32, %p33
      %p35 = scmp.ne.s32.totalorder %s27, %s30
      %p36 = scmp.eq.s32.totalorder %s17, 0
      %p37 = por %p35, %p36
      %p38 = scmp.ne.s32.totalorder %s27, %s30
      %p39 = scmp.eq.s32.totalorder %s22, 1
      %p40 = por %p38, %p39
      %p41 = scmp.ne.s32.totalorder %s30, %s31
      %p42 = scmp.eq.s32.totalorder %s22, 0
      %p43 = por %p41, %p42
      %p44 = scmp.ne.s32.totalorder %s30, %s31
      %p45 = scmp.eq.s32.totalorder %s23, 1
      %p46 = por %p44, %p45
      %p48 = scmp.ne.s32.totalorder %s31, %s47
      %p49 = scmp.eq.s32.totalorder %s23, 0
      %p50 = por %p48, %p49
      %s52 = sadd.s32 %s51, 1
      %p55 = scmp.eq.s32.totalorder %s17, 1
      %p56 = scmp.ne.s32.totalorder %s51, %s53
      %p57 = scmp.eq.s32.totalorder %s17, 0
      %p58 = por %p56, %p57
      %p59 = scmp.ne.s32.totalorder %s51, %s53
      %p60 = scmp.eq.s32.totalorder %s22, 1
      %p61 = por %p59, %p60
      %p62 = scmp.ne.s32.totalorder %s53, %s54
      %p63 = scmp.eq.s32.totalorder %s22, 0
      %p64 = por %p62, %p63
      %p65 = scmp.ne.s32.totalorder %s53, %s54
      %p66 = scmp.eq.s32.totalorder %s23, 1
      %p67 = por %p65, %p66
      %p69 = scmp.ne.s32.totalorder %s54, %s68
      %p70 = scmp.eq.s32.totalorder %s23, 0
      %p71 = por %p69, %p70
      %s73 = sadd.s32 %s72, 1
      %p76 = scmp.eq.s32.totalorder %s17, 1
      %p77 = scmp.ne.s32.totalorder %s72, %s74
      %p78 = scmp.eq.s32.totalorder %s17, 0
      %p79 = por %p77, %p78
      %p80 = scmp.ne.s32.totalorder %s72, %s74
      %p81 = scmp.eq.s32.totalorder %s22, 1
      %p82 = por %p80, %p81
      %p83 = scmp.ne.s32.totalorder %s74, %s75
      %p84 = scmp.eq.s32.totalorder %s22, 0
      %p85 = por %p83, %p84
      %p86 = scmp.ne.s32.totalorder %s74, %s75
      %p87 = scmp.eq.s32.totalorder %s23, 1
      %p88 = por %p86, %p87
      %p90 = scmp.ne.s32.totalorder %s75, %s89
      %p91 = scmp.eq.s32.totalorder %s23, 0
      %p92 = por %p90, %p91
      %s94 = sadd.s32 %s93, 1
      %p97 = scmp.eq.s32.totalorder %s17, 1
      %p98 = scmp.ne.s32.totalorder %s93, %s95
      %p99 = scmp.eq.s32.totalorder %s17, 0
      %p100 = por %p98, %p99
      %p101 = scmp.ne.s32.totalorder %s93, %s95
      %p102 = scmp.eq.s32.totalorder %s22, 1
      %p103 = por %p101, %p102
      %p104 = scmp.ne.s32.totalorder %s95, %s96
      %p105 = scmp.eq.s32.totalorder %s22, 0
      %p106 = por %p104, %p105
      %p107 = scmp.ne.s32.totalorder %s95, %s96
      %p108 = scmp.eq.s32.totalorder %s23, 1
      %p109 = por %p107, %p108
      %p111 = scmp.ne.s32.totalorder %s96, %s110
      %p112 = scmp.eq.s32.totalorder %s23, 0
      %p113 = por %p111, %p112
      %s115 = sadd.s32 %s114, 1
      %p118 = scmp.eq.s32.totalorder %s17, 1
      %p119 = scmp.ne.s32.totalorder %s114, %s116
      %p120 = scmp.eq.s32.totalorder %s17, 0
      %p121 = por %p119, %p120
      %p122 = scmp.ne.s32.totalorder %s114, %s116
      %p123 = scmp.eq.s32.totalorder %s22, 1
      %p124 = por %p122, %p123
      %p125 = scmp.ne.s32.totalorder %s116, %s117
      %p126 = scmp.eq.s32.totalorder %s22, 0
      %p127 = por %p125, %p126
      %p128 = scmp.ne.s32.totalorder %s116, %s117
      %p129 = scmp.eq.s32.totalorder %s23, 1
      %p130 = por %p128, %p129
      %p132 = scmp.ne.s32.totalorder %s117, %s131
      %p133 = scmp.eq.s32.totalorder %s23, 0
      %p134 = por %p132, %p133
      %s136 = sadd.s32 %s135, 1
      %p139 = scmp.eq.s32.totalorder %s17, 1
      %p140 = scmp.ne.s32.totalorder %s135, %s137
      %p141 = scmp.eq.s32.totalorder %s17, 0
      %p142 = por %p140, %p141
      %p143 = scmp.ne.s32.totalorder %s135, %s137
      %p144 = scmp.eq.s32.totalorder %s22, 1
      %p145 = por %p143, %p144
      %p146 = scmp.ne.s32.totalorder %s137, %s138
      %p147 = scmp.eq.s32.totalorder %s22, 0
      %p148 = por %p146, %p147
      %p149 = scmp.ne.s32.totalorder %s137, %s138
      %p150 = scmp.eq.s32.totalorder %s23, 1
      %p151 = por %p149, %p150
      %p153 = scmp.ne.s32.totalorder %s138, %s152
      %p154 = scmp.eq.s32.totalorder %s23, 0
      %p155 = por %p153, %p154
      %s157 = sadd.s32 %s156, 1
      %p160 = scmp.eq.s32.totalorder %s17, 1
      %p161 = scmp.ne.s32.totalorder %s156, %s158
      %p162 = scmp.eq.s32.totalorder %s17, 0
      %p163 = por %p161, %p162
      %p164 = scmp.ne.s32.totalorder %s156, %s158
      %p165 = scmp.eq.s32.totalorder %s22, 1
      %p166 = por %p164, %p165
      %p167 = scmp.ne.s32.totalorder %s158, %s159
      %p168 = scmp.eq.s32.totalorder %s22, 0
      %p169 = por %p167, %p168
      %p170 = scmp.ne.s32.totalorder %s158, %s159
      %p171 = scmp.eq.s32.totalorder %s23, 1
      %p172 = por %p170, %p171
      %p174 = scmp.ne.s32.totalorder %s159, %s173
      %p175 = scmp.eq.s32.totalorder %s23, 0
      %p176 = por %p174, %p175
      %s178 = sadd.s32 %s177, 1
      %p181 = scmp.eq.s32.totalorder %s17, 1
      %p182 = scmp.ne.s32.totalorder %s177, %s179
      %p183 = scmp.eq.s32.totalorder %s17, 0
      %p184 = por %p182, %p183
      %p185 = scmp.ne.s32.totalorder %s177, %s179
      %p186 = scmp.eq.s32.totalorder %s22, 1
      %p187 = por %p185, %p186
      %p188 = scmp.ne.s32.totalorder %s179, %s180
      %p189 = scmp.eq.s32.totalorder %s22, 0
      %p190 = por %p188, %p189
      %p191 = scmp.ne.s32.totalorder %s179, %s180
      %p192 = scmp.eq.s32.totalorder %s23, 1
      %p193 = por %p191, %p192
      %p195 = scmp.ne.s32.totalorder %s180, %s194
      %p196 = scmp.eq.s32.totalorder %s23, 0
      %p197 = por %p195, %p196
      %s198 = ssub.s32 %s17, %s24
      %p199 = scmp.eq.s32.totalorder %s198, 0
      %s201 = sadd.s32 %s200, 1
      %s202 = scalar_select %p199, %s200, %s201
      %p205 = pneg %p199
      %p206 = scmp.eq.s32.totalorder %s17, 1
      %p207 = por %p205, %p206
      %p208 = scmp.ne.s32.totalorder %s200, %s203
      %p209 = scmp.eq.s32.totalorder %s17, 0
      %p210 = por %p208, %p209
      %p211 = scmp.ne.s32.totalorder %s200, %s203
      %p212 = scmp.eq.s32.totalorder %s22, 1
      %p213 = por %p211, %p212
      %p214 = scmp.ne.s32.totalorder %s203, %s204
      %p215 = scmp.eq.s32.totalorder %s22, 0
      %p216 = por %p214, %p215
      %p217 = scmp.ne.s32.totalorder %s203, %s204
      %p218 = scmp.eq.s32.totalorder %s23, 1
      %p219 = por %p217, %p218
      %p221 = scmp.ne.s32.totalorder %s204, %s220
      %p222 = scmp.eq.s32.totalorder %s23, 0
      %p223 = por %p221, %p222
      %p224 = scmp.le.s32.totalorder 1, %s17
      %p225 = scmp.lt.s32.totalorder %s17, 3
      %p226 = pnand %p224, %p225
      %p227 = pneg %p226
      // Predicated region
      $region9: #{tpu_custom_call.1} parent=5 // pred_check
        _
      $region10: #{tpu_custom_call.1} parent=5 // pred_check_branch
        %229 = sbr.rel (%p226) target = $region12
      $region11: #{tpu_custom_call.1} parent=5 // pred_region
        %s230 = ssub.s32 %s17, 1
        // Predicated region
        $region13: #{tpu_custom_call.1} parent=11 // pred_check
          %p231 = pneg %p64
        $region14: #{tpu_custom_call.1} parent=11 // pred_check_branch
          %233 = sbr.rel (%p231) target = $region16
        $region15: #{tpu_custom_call.1} parent=11 // pred_region
          _
        $region16: #{tpu_custom_call.1} parent=11 // pred_fallthru
          _
        // Predicated region
        $region17: #{tpu_custom_call.1} parent=11 // pred_check
          %p234 = pneg %p85
        $region18: #{tpu_custom_call.1} parent=11 // pred_check_branch
          %236 = sbr.rel (%p234) target = $region20
        $region19: #{tpu_custom_call.1} parent=11 // pred_region
          _
        $region20: #{tpu_custom_call.1} parent=11 // pred_fallthru
          _
        // Predicated region
        $region21: #{tpu_custom_call.1} parent=11 // pred_check
          %p237 = pneg %p106
        $region22: #{tpu_custom_call.1} parent=11 // pred_check_branch
          %239 = sbr.rel (%p237) target = $region24
        $region23: #{tpu_custom_call.1} parent=11 // pred_region
          _
        $region24: #{tpu_custom_call.1} parent=11 // pred_fallthru
          _
        // Predicated region
        $region25: #{tpu_custom_call.1} parent=11 // pred_check
          %p240 = pneg %p127
        $region26: #{tpu_custom_call.1} parent=11 // pred_check_branch
          %242 = sbr.rel (%p240) target = $region28
        $region27: #{tpu_custom_call.1} parent=11 // pred_region
          _
        $region28: #{tpu_custom_call.1} parent=11 // pred_fallthru
          _
        // Predicated region
        $region29: #{tpu_custom_call.1} parent=11 // pred_check
          %p243 = pneg %p148
        $region30: #{tpu_custom_call.1} parent=11 // pred_check_branch
          %245 = sbr.rel (%p243) target = $region32
        $region31: #{tpu_custom_call.1} parent=11 // pred_region
          _
        $region32: #{tpu_custom_call.1} parent=11 // pred_fallthru
          _
        // Predicated region
        $region33: #{tpu_custom_call.1} parent=11 // pred_check
          %p246 = pneg %p169
        $region34: #{tpu_custom_call.1} parent=11 // pred_check_branch
          %248 = sbr.rel (%p246) target = $region36
        $region35: #{tpu_custom_call.1} parent=11 // pred_region
          _
        $region36: #{tpu_custom_call.1} parent=11 // pred_fallthru
          _
        // Predicated region
        $region37: #{tpu_custom_call.1} parent=11 // pred_check
          %p249 = pneg %p190
        $region38: #{tpu_custom_call.1} parent=11 // pred_check_branch
          %251 = sbr.rel (%p249) target = $region40
        $region39: #{tpu_custom_call.1} parent=11 // pred_region
          _
        $region40: #{tpu_custom_call.1} parent=11 // pred_fallthru
          _
      $region12: #{tpu_custom_call.1} parent=5 // pred_fallthru
        _
      %p252 = scmp.lt.s32.totalorder %s17, 2
      // Predicated region
      $region41: #{tpu_custom_call.1} parent=5 // pred_check
        %p253 = pneg %p252
      $region42: #{tpu_custom_call.1} parent=5 // pred_check_branch
        %255 = sbr.rel (%p253) target = $region44
      $region43: #{tpu_custom_call.1} parent=5 // pred_region
        // Predicated region
        $region45: #{tpu_custom_call.1} parent=43 // pred_check
          %p256 = pneg %p37
        $region46: #{tpu_custom_call.1} parent=43 // pred_check_branch
          %258 = sbr.rel (%p256) target = $region48
        $region47: #{tpu_custom_call.1} parent=43 // pred_region
          %p259 = scmp.lt.s32.totalorder %s17, 1
          %s260 = scalar_select %p259, %s17, 1
          %s261 = smul.addr %s260, 32
          %s262 = smul.addr %s261, 8
          %s263 = scalar_lea.vmem %s0, %s262
        $region48: #{tpu_custom_call.1} parent=43 // pred_fallthru
          _
      $region44: #{tpu_custom_call.1} parent=5 // pred_fallthru
        _
      %p264 = scmp.le.s32.totalorder 1, %s17
      %p265 = scmp.lt.s32.totalorder %s17, 3
      %p266 = pnand %p264, %p265
      %p267 = pneg %p266
      // Predicated region
      $region49: #{tpu_custom_call.1} parent=5 // pred_check
        _
      $region50: #{tpu_custom_call.1} parent=5 // pred_check_branch
        %269 = sbr.rel (%p266) target = $region52
      $region51: #{tpu_custom_call.1} parent=5 // pred_region
        %s270 = ssub.s32 %s17, 1
        %p271 = scmp.lt.s32.totalorder %s22, 1
        %s272 = scalar_select %p271, %s22, 1
        %s273 = smul.addr %s272, 32
        %s274 = smul.addr %s273, 8
        %s275 = scalar_lea.vmem %s0, %s274
        %p276 = pneg %p43
        %p277 = pneg %p40
        %p278 = pneg %p64
        %p279 = pneg %p61
        %p280 = pneg %p85
        %p281 = pneg %p82
        %p282 = pneg %p106
        %p283 = pneg %p103
        %p284 = pneg %p127
        %p285 = pneg %p124
        %p286 = pneg %p148
        %p287 = pneg %p145
        %p288 = pneg %p169
        %p289 = pneg %p166
        %p290 = pneg %p190
        %p291 = pneg %p187
        %p292 = pneg %p216
        %p293 = pneg %p213
        %s294 = sand.u32 %s203, 1
        %s295 = scalar_lea.sflag [#allocation7], %s294
        %s296 = sand.u32 %s203, 1
        %s297 = smul.addr %s296, 64
        %s298 = scalar_lea.vmem [#allocation6], %s297
        %p299 = scmp.lt.s32.totalorder %s22, 1
        %s300 = scalar_select %p299, %s22, 1
        %s301 = smul.addr %s300, 32
        %s302 = smul.addr %s301, 8
        %s303 = scalar_lea.vmem %s0, %s302
        %vm304 = vcmask 31744
        %305 = vst.msk [vmem:[#allocation2] sm:$0xff] %vm304, 0.0
        %306 = vst.msk [vmem:[#allocation2 + $0x8] sm:$0xff] %vm304, 0.0
        %vm307 = vcmask 25600
        %308 = vst.msk [vmem:[#allocation2 + $0x10] sm:$0x3] %vm307, 0.0
        %s309 = scalar_lea.vmem [#allocation2], 408
        %310 = vst.msk [vmem:[%s309] sm:$0xff] %vm304, 0.0
        %311 = vst.msk [vmem:[%s309 + $0x8] sm:$0xff] %vm304, 0.0
        %312 = vst.msk [vmem:[%s309 + $0x10] sm:$0x3] %vm307, 0.0
        %s313 = scalar_lea.vmem [#allocation2], 24
        %vm314 = vcmask 24576
        %315 = vst.msk [vmem:[%s313] sm:$0x1] %vm314, 0.0
        %316 = vst.msk [vmem:[%s313 + $0x18] sm:$0x1] %vm314, 0.0
        %317 = vst.msk [vmem:[%s313 + $0x30] sm:$0x1] %vm314, 0.0
        %318 = vst.msk [vmem:[%s313 + $0x48] sm:$0x1] %vm314, 0.0
        %319 = vst.msk [vmem:[%s313 + $0x60] sm:$0x1] %vm314, 0.0
        %320 = vst.msk [vmem:[%s313 + $0x78] sm:$0x1] %vm314, 0.0
        %321 = vst.msk [vmem:[%s313 + $0x90] sm:$0x1] %vm314, 0.0
        %322 = vst.msk [vmem:[%s313 + $0xa8] sm:$0x1] %vm314, 0.0
        %323 = vst.msk [vmem:[%s313 + $0xc0] sm:$0x1] %vm314, 0.0
        %324 = vst.msk [vmem:[%s313 + $0xd8] sm:$0x1] %vm314, 0.0
        %325 = vst.msk [vmem:[%s313 + $0xf0] sm:$0x1] %vm314, 0.0
        %326 = vst.msk [vmem:[%s313 + $0x108] sm:$0x1] %vm314, 0.0
        %327 = vst.msk [vmem:[%s313 + $0x120] sm:$0x1] %vm314, 0.0
        %328 = vst.msk [vmem:[%s313 + $0x138] sm:$0x1] %vm314, 0.0
        %329 = vst.msk [vmem:[%s313 + $0x150] sm:$0x1] %vm314, 0.0
        %330 = vst.msk [vmem:[%s313 + $0x168] sm:$0x1] %vm314, 0.0
        %331 = vst.msk [vmem:[%s313 + $0x11] sm:$0x1] %vm314, 0.0
        %332 = vst.msk [vmem:[%s313 + $0x29] sm:$0x1] %vm314, 0.0
        %333 = vst.msk [vmem:[%s313 + $0x41] sm:$0x1] %vm314, 0.0
        %334 = vst.msk [vmem:[%s313 + $0x59] sm:$0x1] %vm314, 0.0
        %335 = vst.msk [vmem:[%s313 + $0x71] sm:$0x1] %vm314, 0.0
        %336 = vst.msk [vmem:[%s313 + $0x89] sm:$0x1] %vm314, 0.0
        %337 = vst.msk [vmem:[%s313 + $0xa1] sm:$0x1] %vm314, 0.0
        %338 = vst.msk [vmem:[%s313 + $0xb9] sm:$0x1] %vm314, 0.0
        %339 = vst.msk [vmem:[%s313 + $0xd1] sm:$0x1] %vm314, 0.0
        %340 = vst.msk [vmem:[%s313 + $0xe9] sm:$0x1] %vm314, 0.0
        %341 = vst.msk [vmem:[%s313 + $0x101] sm:$0x1] %vm314, 0.0
        %342 = vst.msk [vmem:[%s313 + $0x119] sm:$0x1] %vm314, 0.0
        %343 = vst.msk [vmem:[%s313 + $0x131] sm:$0x1] %vm314, 0.0
        %344 = vst.msk [vmem:[%s313 + $0x149] sm:$0x1] %vm314, 0.0
        %345 = vst.msk [vmem:[%s313 + $0x161] sm:$0x1] %vm314, 0.0
        %346 = vst.msk [vmem:[%s313 + $0x179] sm:$0x1] %vm314, 0.0
        %vm347 = vcmask 64512
        %348 = vst.msk [vmem:[#allocation3] sm:$0xff] %vm347, 0.0
        %vm349 = vcmask 58368
        %350 = vst.msk [vmem:[#allocation3 + $0x8] sm:$0x3] %vm349, 0.0
        %s351 = scalar_lea.vmem [#allocation3], 144
        %352 = vst.msk [vmem:[%s351] sm:$0xff] %vm347, 0.0
        %353 = vst.msk [vmem:[%s351 + $0x8] sm:$0x3] %vm349, 0.0
        %s354 = scalar_lea.vmem [#allocation3], 16
        %vm355 = vcmask 57344
        %356 = vst.msk [vmem:[%s354] sm:$0x1] %vm355, 0.0
        %357 = vst.msk [vmem:[%s354 + $0x10] sm:$0x1] %vm355, 0.0
        %358 = vst.msk [vmem:[%s354 + $0x20] sm:$0x1] %vm355, 0.0
        %359 = vst.msk [vmem:[%s354 + $0x30] sm:$0x1] %vm355, 0.0
        %360 = vst.msk [vmem:[%s354 + $0x40] sm:$0x1] %vm355, 0.0
        %361 = vst.msk [vmem:[%s354 + $0x50] sm:$0x1] %vm355, 0.0
        %362 = vst.msk [vmem:[%s354 + $0x60] sm:$0x1] %vm355, 0.0
        %363 = vst.msk [vmem:[%s354 + $0x70] sm:$0x1] %vm355, 0.0
        %364 = vst.msk [vmem:[%s354 + $0x9] sm:$0x1] %vm355, 0.0
        %365 = vst.msk [vmem:[%s354 + $0x19] sm:$0x1] %vm355, 0.0
        %366 = vst.msk [vmem:[%s354 + $0x29] sm:$0x1] %vm355, 0.0
        %367 = vst.msk [vmem:[%s354 + $0x39] sm:$0x1] %vm355, 0.0
        %368 = vst.msk [vmem:[%s354 + $0x49] sm:$0x1] %vm355, 0.0
        %369 = vst.msk [vmem:[%s354 + $0x59] sm:$0x1] %vm355, 0.0
        %370 = vst.msk [vmem:[%s354 + $0x69] sm:$0x1] %vm355, 0.0
        %371 = vst.msk [vmem:[%s354 + $0x79] sm:$0x1] %vm355, 0.0
        %v372 = vld [vmem:[%s303] sm:$0xff]
        %v373 = vld [vmem:[%s303 + $0x8] sm:$0xff]
        %v374 = vld [vmem:[%s303 + $0x10] sm:$0xff]
        %v375 = vld [vmem:[%s303 + $0x18] sm:$0xff]
        %v376 = vld [vmem:[%s303 + $0x20] sm:$0xff]
        %v377 = vld [vmem:[%s303 + $0x28] sm:$0xff]
        %v378 = vld [vmem:[%s303 + $0x30] sm:$0xff]
        %v379 = vld [vmem:[%s303 + $0x38] sm:$0xff]
        %v380 = vld [vmem:[%s303 + $0x40] sm:$0xff]
        %v381 = vld [vmem:[%s303 + $0x48] sm:$0xff]
        %v382 = vld [vmem:[%s303 + $0x50] sm:$0xff]
        %v383 = vld [vmem:[%s303 + $0x58] sm:$0xff]
        %v384 = vld [vmem:[%s303 + $0x60] sm:$0xff]
        %v385 = vld [vmem:[%s303 + $0x68] sm:$0xff]
        %v386 = vld [vmem:[%s303 + $0x70] sm:$0xff]
        %v387 = vld [vmem:[%s303 + $0x78] sm:$0xff]
        %v388 = vld [vmem:[%s303 + $0x80] sm:$0xff]
        %v389 = vld [vmem:[%s303 + $0x88] sm:$0xff]
        %v390 = vld [vmem:[%s303 + $0x90] sm:$0xff]
        %v391 = vld [vmem:[%s303 + $0x98] sm:$0xff]
        %v392 = vld [vmem:[%s303 + $0xa0] sm:$0xff]
        %v393 = vld [vmem:[%s303 + $0xa8] sm:$0xff]
        %v394 = vld [vmem:[%s303 + $0xb0] sm:$0xff]
        %v395 = vld [vmem:[%s303 + $0xb8] sm:$0xff]
        %v396 = vld [vmem:[%s303 + $0xc0] sm:$0xff]
        %v397 = vld [vmem:[%s303 + $0xc8] sm:$0xff]
        %v398 = vld [vmem:[%s303 + $0xd0] sm:$0xff]
        %v399 = vld [vmem:[%s303 + $0xd8] sm:$0xff]
        %v400 = vld [vmem:[%s303 + $0xe0] sm:$0xff]
        %v401 = vld [vmem:[%s303 + $0xe8] sm:$0xff]
        %v402 = vld [vmem:[%s303 + $0xf0] sm:$0xff]
        %v403 = vld [vmem:[%s303 + $0xf8] sm:$0xff]
        %v404 = vld [vmem:[%s2] sm:$0x1]
        %v406 = vlaneseq
        %v407 = vshrl.u32 %v406, 7
        %v408 = vsub.s32 0, %v407
        %v409 = vrot.slane %v404, %v408
        %v411 = vmul.f32 %v372, %v409
        %v412 = vmul.f32 %v373, %v409
        %v413 = vmul.f32 %v374, %v409
        %v414 = vmul.f32 %v375, %v409
        %v415 = vmul.f32 %v376, %v409
        %v416 = vmul.f32 %v377, %v409
        %v417 = vmul.f32 %v378, %v409
        %v418 = vmul.f32 %v379, %v409
        %v419 = vmul.f32 %v380, %v409
        %v420 = vmul.f32 %v381, %v409
        %v421 = vmul.f32 %v382, %v409
        %v422 = vmul.f32 %v383, %v409
        %v423 = vmul.f32 %v384, %v409
        %v424 = vmul.f32 %v385, %v409
        %v425 = vmul.f32 %v386, %v409
        %v426 = vmul.f32 %v387, %v409
        %v427 = vmul.f32 %v388, %v409
        %v428 = vmul.f32 %v389, %v409
        %v429 = vmul.f32 %v390, %v409
        %v430 = vmul.f32 %v391, %v409
        %v431 = vmul.f32 %v392, %v409
        %v432 = vmul.f32 %v393, %v409
        %v433 = vmul.f32 %v394, %v409
        %v434 = vmul.f32 %v395, %v409
        %v435 = vmul.f32 %v396, %v409
        %v436 = vmul.f32 %v397, %v409
        %v437 = vmul.f32 %v398, %v409
        %v438 = vmul.f32 %v399, %v409
        %v439 = vmul.f32 %v400, %v409
        %v440 = vmul.f32 %v401, %v409
        %v441 = vmul.f32 %v402, %v409
        %v442 = vmul.f32 %v403, %v409
        %v443 = vld [vmem:[%s3] sm:$0x1]
        %v445 = vlaneseq
        %v446 = vshrl.u32 %v445, 7
        %v447 = vsub.s32 0, %v446
        %v448 = vrot.slane %v443, %v447
        %v450 = vadd.f32 %v411, %v448
        %v451 = vadd.f32 %v412, %v448
        %v452 = vadd.f32 %v413, %v448
        %v453 = vadd.f32 %v414, %v448
        %v454 = vadd.f32 %v415, %v448
        %v455 = vadd.f32 %v416, %v448
        %v456 = vadd.f32 %v417, %v448
        %v457 = vadd.f32 %v418, %v448
        %v458 = vadd.f32 %v419, %v448
        %v459 = vadd.f32 %v420, %v448
        %v460 = vadd.f32 %v421, %v448
        %v461 = vadd.f32 %v422, %v448
        %v462 = vadd.f32 %v423, %v448
        %v463 = vadd.f32 %v424, %v448
        %v464 = vadd.f32 %v425, %v448
        %v465 = vadd.f32 %v426, %v448
        %v466 = vadd.f32 %v427, %v448
        %v467 = vadd.f32 %v428, %v448
        %v468 = vadd.f32 %v429, %v448
        %v469 = vadd.f32 %v430, %v448
        %v470 = vadd.f32 %v431, %v448
        %v471 = vadd.f32 %v432, %v448
        %v472 = vadd.f32 %v433, %v448
        %v473 = vadd.f32 %v434, %v448
        %v474 = vadd.f32 %v435, %v448
        %v475 = vadd.f32 %v436, %v448
        %v476 = vadd.f32 %v437, %v448
        %v477 = vadd.f32 %v438, %v448
        %v478 = vadd.f32 %v439, %v448
        %v479 = vadd.f32 %v440, %v448
        %v480 = vadd.f32 %v441, %v448
        %v481 = vadd.f32 %v442, %v448
        %vm482 = vcmp.ge.f32.partialorder %v450, 0.0
        %vm483 = vcmp.ge.f32.partialorder %v451, 0.0
        %vm484 = vcmp.ge.f32.partialorder %v452, 0.0
        %vm485 = vcmp.ge.f32.partialorder %v453, 0.0
        %vm486 = vcmp.ge.f32.partialorder %v454, 0.0
        %vm487 = vcmp.ge.f32.partialorder %v455, 0.0
        %vm488 = vcmp.ge.f32.partialorder %v456, 0.0
        %vm489 = vcmp.ge.f32.partialorder %v457, 0.0
        %vm490 = vcmp.ge.f32.partialorder %v458, 0.0
        %vm491 = vcmp.ge.f32.partialorder %v459, 0.0
        %vm492 = vcmp.ge.f32.partialorder %v460, 0.0
        %vm493 = vcmp.ge.f32.partialorder %v461, 0.0
        %vm494 = vcmp.ge.f32.partialorder %v462, 0.0
        %vm495 = vcmp.ge.f32.partialorder %v463, 0.0
        %vm496 = vcmp.ge.f32.partialorder %v464, 0.0
        %vm497 = vcmp.ge.f32.partialorder %v465, 0.0
        %vm498 = vcmp.ge.f32.partialorder %v466, 0.0
        %vm499 = vcmp.ge.f32.partialorder %v467, 0.0
        %vm500 = vcmp.ge.f32.partialorder %v468, 0.0
        %vm501 = vcmp.ge.f32.partialorder %v469, 0.0
        %vm502 = vcmp.ge.f32.partialorder %v470, 0.0
        %vm503 = vcmp.ge.f32.partialorder %v471, 0.0
        %vm504 = vcmp.ge.f32.partialorder %v472, 0.0
        %vm505 = vcmp.ge.f32.partialorder %v473, 0.0
        %vm506 = vcmp.ge.f32.partialorder %v474, 0.0
        %vm507 = vcmp.ge.f32.partialorder %v475, 0.0
        %vm508 = vcmp.ge.f32.partialorder %v476, 0.0
        %vm509 = vcmp.ge.f32.partialorder %v477, 0.0
        %vm510 = vcmp.ge.f32.partialorder %v478, 0.0
        %vm511 = vcmp.ge.f32.partialorder %v479, 0.0
        %vm512 = vcmp.ge.f32.partialorder %v480, 0.0
        %vm513 = vcmp.ge.f32.partialorder %v481, 0.0
        %v514 = vmul.f32 %v450, 0.01
        %v515 = vmul.f32 %v451, 0.01
        %v516 = vmul.f32 %v452, 0.01
        %v517 = vmul.f32 %v453, 0.01
        %v518 = vmul.f32 %v454, 0.01
        %v519 = vmul.f32 %v455, 0.01
        %v520 = vmul.f32 %v456, 0.01
        %v521 = vmul.f32 %v457, 0.01
        %v522 = vmul.f32 %v458, 0.01
        %v523 = vmul.f32 %v459, 0.01
        %v524 = vmul.f32 %v460, 0.01
        %v525 = vmul.f32 %v461, 0.01
        %v526 = vmul.f32 %v462, 0.01
        %v527 = vmul.f32 %v463, 0.01
        %v528 = vmul.f32 %v464, 0.01
        %v529 = vmul.f32 %v465, 0.01
        %v530 = vmul.f32 %v466, 0.01
        %v531 = vmul.f32 %v467, 0.01
        %v532 = vmul.f32 %v468, 0.01
        %v533 = vmul.f32 %v469, 0.01
        %v534 = vmul.f32 %v470, 0.01
        %v535 = vmul.f32 %v471, 0.01
        %v536 = vmul.f32 %v472, 0.01
        %v537 = vmul.f32 %v473, 0.01
        %v538 = vmul.f32 %v474, 0.01
        %v539 = vmul.f32 %v475, 0.01
        %v540 = vmul.f32 %v476, 0.01
        %v541 = vmul.f32 %v477, 0.01
        %v542 = vmul.f32 %v478, 0.01
        %v543 = vmul.f32 %v479, 0.01
        %v544 = vmul.f32 %v480, 0.01
        %v545 = vmul.f32 %v481, 0.01
        %v546 = vsel %vm482, %v450, %v514
        %v547 = vsel %vm483, %v451, %v515
        %v548 = vsel %vm484, %v452, %v516
        %v549 = vsel %vm485, %v453, %v517
        %v550 = vsel %vm486, %v454, %v518
        %v551 = vsel %vm487, %v455, %v519
        %v552 = vsel %vm488, %v456, %v520
        %v553 = vsel %vm489, %v457, %v521
        %v554 = vsel %vm490, %v458, %v522
        %v555 = vsel %vm491, %v459, %v523
        %v556 = vsel %vm492, %v460, %v524
        %v557 = vsel %vm493, %v461, %v525
        %v558 = vsel %vm494, %v462, %v526
        %v559 = vsel %vm495, %v463, %v527
        %v560 = vsel %vm496, %v464, %v528
        %v561 = vsel %vm497, %v465, %v529
        %v562 = vsel %vm498, %v466, %v530
        %v563 = vsel %vm499, %v467, %v531
        %v564 = vsel %vm500, %v468, %v532
        %v565 = vsel %vm501, %v469, %v533
        %v566 = vsel %vm502, %v470, %v534
        %v567 = vsel %vm503, %v471, %v535
        %v568 = vsel %vm504, %v472, %v536
        %v569 = vsel %vm505, %v473, %v537
        %v570 = vsel %vm506, %v474, %v538
        %v571 = vsel %vm507, %v475, %v539
        %v572 = vsel %vm508, %v476, %v540
        %v573 = vsel %vm509, %v477, %v541
        %v574 = vsel %vm510, %v478, %v542
        %v575 = vsel %vm511, %v479, %v543
        %v576 = vsel %vm512, %v480, %v544
        %v577 = vsel %vm513, %v481, %v545
        %578 = vst.msk [vmem:[%s313 + $0x1] sm:$0xff] %vm304, %v546
        %579 = vst.msk [vmem:[%s313 + $0x9] sm:$0xff] %vm304, %v547
        %580 = vst.msk [vmem:[%s313 + $0x19] sm:$0xff] %vm304, %v548
        %581 = vst.msk [vmem:[%s313 + $0x21] sm:$0xff] %vm304, %v549
        %582 = vst.msk [vmem:[%s313 + $0x31] sm:$0xff] %vm304, %v550
        %583 = vst.msk [vmem:[%s313 + $0x39] sm:$0xff] %vm304, %v551
        %584 = vst.msk [vmem:[%s313 + $0x49] sm:$0xff] %vm304, %v552
        %585 = vst.msk [vmem:[%s313 + $0x51] sm:$0xff] %vm304, %v553
        %586 = vst.msk [vmem:[%s313 + $0x61] sm:$0xff] %vm304, %v554
        %587 = vst.msk [vmem:[%s313 + $0x69] sm:$0xff] %vm304, %v555
        %588 = vst.msk [vmem:[%s313 + $0x79] sm:$0xff] %vm304, %v556
        %589 = vst.msk [vmem:[%s313 + $0x81] sm:$0xff] %vm304, %v557
        %590 = vst.msk [vmem:[%s313 + $0x91] sm:$0xff] %vm304, %v558
        %591 = vst.msk [vmem:[%s313 + $0x99] sm:$0xff] %vm304, %v559
        %592 = vst.msk [vmem:[%s313 + $0xa9] sm:$0xff] %vm304, %v560
        %593 = vst.msk [vmem:[%s313 + $0xb1] sm:$0xff] %vm304, %v561
        %594 = vst.msk [vmem:[%s313 + $0xc1] sm:$0xff] %vm304, %v562
        %595 = vst.msk [vmem:[%s313 + $0xc9] sm:$0xff] %vm304, %v563
        %596 = vst.msk [vmem:[%s313 + $0xd9] sm:$0xff] %vm304, %v564
        %597 = vst.msk [vmem:[%s313 + $0xe1] sm:$0xff] %vm304, %v565
        %598 = vst.msk [vmem:[%s313 + $0xf1] sm:$0xff] %vm304, %v566
        %599 = vst.msk [vmem:[%s313 + $0xf9] sm:$0xff] %vm304, %v567
        %600 = vst.msk [vmem:[%s313 + $0x109] sm:$0xff] %vm304, %v568
        %601 = vst.msk [vmem:[%s313 + $0x111] sm:$0xff] %vm304, %v569
        %602 = vst.msk [vmem:[%s313 + $0x121] sm:$0xff] %vm304, %v570
        %603 = vst.msk [vmem:[%s313 + $0x129] sm:$0xff] %vm304, %v571
        %604 = vst.msk [vmem:[%s313 + $0x139] sm:$0xff] %vm304, %v572
        %605 = vst.msk [vmem:[%s313 + $0x141] sm:$0xff] %vm304, %v573
        %606 = vst.msk [vmem:[%s313 + $0x151] sm:$0xff] %vm304, %v574
        %607 = vst.msk [vmem:[%s313 + $0x159] sm:$0xff] %vm304, %v575
        %608 = vst.msk [vmem:[%s313 + $0x169] sm:$0xff] %vm304, %v576
        %609 = vst.msk [vmem:[%s313 + $0x171] sm:$0xff] %vm304, %v577
        %v610 = vld [vmem:[#allocation2] ss:$2 sm:$0xff]
        %s611 = scalar_lea.vmem [#allocation2], 48
        %v612 = vld [vmem:[%s611] ss:$2 sm:$0xff]
        %s613 = scalar_lea.vmem [#allocation2], 96
        %v614 = vld [vmem:[%s613] ss:$2 sm:$0xff]
        %s615 = scalar_lea.vmem [#allocation2], 144
        %v616 = vld [vmem:[%s615] ss:$2 sm:$0xff]
        %s617 = scalar_lea.vmem [#allocation2], 192
        %v618 = vld [vmem:[%s617] ss:$2 sm:$0xff]
        %s619 = scalar_lea.vmem [#allocation2], 240
        %v620 = vld [vmem:[%s619] ss:$2 sm:$0xff]
        %s621 = scalar_lea.vmem [#allocation2], 288
        %v622 = vld [vmem:[%s621] ss:$2 sm:$0xff]
        %s623 = scalar_lea.vmem [#allocation2], 336
        %v624 = vld [vmem:[%s623] ss:$2 sm:$0xff]
        %625 = vst.msk [vmem:[#allocation4] sm:$0xff] %vm304, %v610
        %626 = vst.msk [vmem:[#allocation4 + $0x8] sm:$0xff] %vm304, %v612
        %627 = vst.msk [vmem:[#allocation4 + $0x10] sm:$0xff] %vm304, %v614
        %628 = vst.msk [vmem:[#allocation4 + $0x18] sm:$0xff] %vm304, %v616
        %629 = vst.msk [vmem:[#allocation4 + $0x20] sm:$0xff] %vm304, %v618
        %630 = vst.msk [vmem:[#allocation4 + $0x28] sm:$0xff] %vm304, %v620
        %631 = vst.msk [vmem:[#allocation4 + $0x30] sm:$0xff] %vm304, %v622
        %632 = vst.msk [vmem:[#allocation4 + $0x38] sm:$0xff] %vm304, %v624
        %s633 = scalar_lea.vmem [#allocation2], 1
        %v634 = vld [vmem:[%s633] ss:$2 sm:$0xff]
        %s635 = scalar_lea.vmem [#allocation2], 49
        %v636 = vld [vmem:[%s635] ss:$2 sm:$0xff]
        %s637 = scalar_lea.vmem [#allocation2], 97
        %v638 = vld [vmem:[%s637] ss:$2 sm:$0xff]
        %s639 = scalar_lea.vmem [#allocation2], 145
        %v640 = vld [vmem:[%s639] ss:$2 sm:$0xff]
        %s641 = scalar_lea.vmem [#allocation2], 193
        %v642 = vld [vmem:[%s641] ss:$2 sm:$0xff]
        %s643 = scalar_lea.vmem [#allocation2], 241
        %v644 = vld [vmem:[%s643] ss:$2 sm:$0xff]
        %s645 = scalar_lea.vmem [#allocation2], 289
        %v646 = vld [vmem:[%s645] ss:$2 sm:$0xff]
        %s647 = scalar_lea.vmem [#allocation2], 337
        %v648 = vld [vmem:[%s647] ss:$2 sm:$0xff]
        %657 = vrot.lane.b32.xlu0 %v634, 4
        %v658 = vpop.permute.xlu0 %657
        %659 = vrot.lane.b32.xlu0 %v636, 4
        %v660 = vpop.permute.xlu0 %659
        %661 = vrot.lane.b32.xlu0 %v638, 4
        %v662 = vpop.permute.xlu0 %661
        %663 = vrot.lane.b32.xlu0 %v640, 4
        %v664 = vpop.permute.xlu0 %663
        %665 = vrot.lane.b32.xlu0 %v642, 4
        %v666 = vpop.permute.xlu0 %665
        %667 = vrot.lane.b32.xlu0 %v644, 4
        %v668 = vpop.permute.xlu0 %667
        %669 = vrot.lane.b32.xlu0 %v646, 4
        %v670 = vpop.permute.xlu0 %669
        %671 = vrot.lane.b32.xlu0 %v648, 4
        %v672 = vpop.permute.xlu0 %671
        %vm681 = vcmask 64544
        %682 = vst.msk [vmem:[#allocation4] sm:$0xff] %vm681, %v658
        %683 = vst.msk [vmem:[#allocation4 + $0x8] sm:$0xff] %vm681, %v660
        %684 = vst.msk [vmem:[#allocation4 + $0x10] sm:$0xff] %vm681, %v662
        %685 = vst.msk [vmem:[#allocation4 + $0x18] sm:$0xff] %vm681, %v664
        %686 = vst.msk [vmem:[#allocation4 + $0x20] sm:$0xff] %vm681, %v666
        %687 = vst.msk [vmem:[#allocation4 + $0x28] sm:$0xff] %vm681, %v668
        %688 = vst.msk [vmem:[#allocation4 + $0x30] sm:$0xff] %vm681, %v670
        %689 = vst.msk [vmem:[#allocation4 + $0x38] sm:$0xff] %vm681, %v672
        %s690 = scalar_lea.vmem [#allocation2], 2
        %v691 = vld [vmem:[%s690] ss:$2 sm:$0xff]
        %s692 = scalar_lea.vmem [#allocation2], 50
        %v693 = vld [vmem:[%s692] ss:$2 sm:$0xff]
        %s694 = scalar_lea.vmem [#allocation2], 98
        %v695 = vld [vmem:[%s694] ss:$2 sm:$0xff]
        %s696 = scalar_lea.vmem [#allocation2], 146
        %v697 = vld [vmem:[%s696] ss:$2 sm:$0xff]
        %s698 = scalar_lea.vmem [#allocation2], 194
        %v699 = vld [vmem:[%s698] ss:$2 sm:$0xff]
        %s700 = scalar_lea.vmem [#allocation2], 242
        %v701 = vld [vmem:[%s700] ss:$2 sm:$0xff]
        %s702 = scalar_lea.vmem [#allocation2], 290
        %v703 = vld [vmem:[%s702] ss:$2 sm:$0xff]
        %s704 = scalar_lea.vmem [#allocation2], 338
        %v705 = vld [vmem:[%s704] ss:$2 sm:$0xff]
        %714 = vrot.lane.b32.xlu0 %v691, 8
        %v715 = vpop.permute.xlu0 %714
        %716 = vrot.lane.b32.xlu0 %v693, 8
        %v717 = vpop.permute.xlu0 %716
        %718 = vrot.lane.b32.xlu0 %v695, 8
        %v719 = vpop.permute.xlu0 %718
        %720 = vrot.lane.b32.xlu0 %v697, 8
        %v721 = vpop.permute.xlu0 %720
        %722 = vrot.lane.b32.xlu0 %v699, 8
        %v723 = vpop.permute.xlu0 %722
        %724 = vrot.lane.b32.xlu0 %v701, 8
        %v725 = vpop.permute.xlu0 %724
        %726 = vrot.lane.b32.xlu0 %v703, 8
        %v727 = vpop.permute.xlu0 %726
        %728 = vrot.lane.b32.xlu0 %v705, 8
        %v729 = vpop.permute.xlu0 %728
        %vm738 = vcmask 97344
        %739 = vst.msk [vmem:[#allocation4] sm:$0xff] %vm738, %v715
        %740 = vst.msk [vmem:[#allocation4 + $0x8] sm:$0xff] %vm738, %v717
        %741 = vst.msk [vmem:[#allocation4 + $0x10] sm:$0xff] %vm738, %v719
        %742 = vst.msk [vmem:[#allocation4 + $0x18] sm:$0xff] %vm738, %v721
        %743 = vst.msk [vmem:[#allocation4 + $0x20] sm:$0xff] %vm738, %v723
        %744 = vst.msk [vmem:[#allocation4 + $0x28] sm:$0xff] %vm738, %v725
        %745 = vst.msk [vmem:[#allocation4 + $0x30] sm:$0xff] %vm738, %v727
        %746 = vst.msk [vmem:[#allocation4 + $0x38] sm:$0xff] %vm738, %v729
        %v747 = vld [vmem:[%s313] ss:$2 sm:$0xff]
        %s748 = scalar_lea.vmem %s313, 48 [#allocation2]
        %v749 = vld [vmem:[%s748] ss:$2 sm:$0xff]
        %s750 = scalar_lea.vmem %s313, 96 [#allocation2]
        %v751 = vld [vmem:[%s750] ss:$2 sm:$0xff]
        %s752 = scalar_lea.vmem %s313, 144 [#allocation2]
        %v753 = vld [vmem:[%s752] ss:$2 sm:$0xff]
        %s754 = scalar_lea.vmem %s313, 192 [#allocation2]
        %v755 = vld [vmem:[%s754] ss:$2 sm:$0xff]
        %s756 = scalar_lea.vmem %s313, 240 [#allocation2]
        %v757 = vld [vmem:[%s756] ss:$2 sm:$0xff]
        %s758 = scalar_lea.vmem %s313, 288 [#allocation2]
        %v759 = vld [vmem:[%s758] ss:$2 sm:$0xff]
        %s760 = scalar_lea.vmem %s313, 336 [#allocation2]
        %v761 = vld [vmem:[%s760] ss:$2 sm:$0xff]
        %770 = vrot.lane.b32.xlu0 %v747, 12
        %v771 = vpop.permute.xlu0 %770
        %772 = vrot.lane.b32.xlu0 %v749, 12
        %v773 = vpop.permute.xlu0 %772
        %774 = vrot.lane.b32.xlu0 %v751, 12
        %v775 = vpop.permute.xlu0 %774
        %776 = vrot.lane.b32.xlu0 %v753, 12
        %v777 = vpop.permute.xlu0 %776
        %778 = vrot.lane.b32.xlu0 %v755, 12
        %v779 = vpop.permute.xlu0 %778
        %780 = vrot.lane.b32.xlu0 %v757, 12
        %v781 = vpop.permute.xlu0 %780
        %782 = vrot.lane.b32.xlu0 %v759, 12
        %v783 = vpop.permute.xlu0 %782
        %784 = vrot.lane.b32.xlu0 %v761, 12
        %v785 = vpop.permute.xlu0 %784
        %vm794 = vcmask 130144
        %795 = vst.msk [vmem:[#allocation4] sm:$0xff] %vm794, %v771
        %796 = vst.msk [vmem:[#allocation4 + $0x8] sm:$0xff] %vm794, %v773
        %797 = vst.msk [vmem:[#allocation4 + $0x10] sm:$0xff] %vm794, %v775
        %798 = vst.msk [vmem:[#allocation4 + $0x18] sm:$0xff] %vm794, %v777
        %799 = vst.msk [vmem:[#allocation4 + $0x20] sm:$0xff] %vm794, %v779
        %800 = vst.msk [vmem:[#allocation4 + $0x28] sm:$0xff] %vm794, %v781
        %801 = vst.msk [vmem:[#allocation4 + $0x30] sm:$0xff] %vm794, %v783
        %802 = vst.msk [vmem:[#allocation4 + $0x38] sm:$0xff] %vm794, %v785
        %s803 = scalar_lea.vmem %s313, 1 [#allocation2]
        %v804 = vld [vmem:[%s803] ss:$2 sm:$0xff]
        %s805 = scalar_lea.vmem %s313, 49 [#allocation2]
        %v806 = vld [vmem:[%s805] ss:$2 sm:$0xff]
        %s807 = scalar_lea.vmem %s313, 97 [#allocation2]
        %v808 = vld [vmem:[%s807] ss:$2 sm:$0xff]
        %s809 = scalar_lea.vmem %s313, 145 [#allocation2]
        %v810 = vld [vmem:[%s809] ss:$2 sm:$0xff]
        %s811 = scalar_lea.vmem %s313, 193 [#allocation2]
        %v812 = vld [vmem:[%s811] ss:$2 sm:$0xff]
        %s813 = scalar_lea.vmem %s313, 241 [#allocation2]
        %v814 = vld [vmem:[%s813] ss:$2 sm:$0xff]
        %s815 = scalar_lea.vmem %s313, 289 [#allocation2]
        %v816 = vld [vmem:[%s815] ss:$2 sm:$0xff]
        %s817 = scalar_lea.vmem %s313, 337 [#allocation2]
        %v818 = vld [vmem:[%s817] ss:$2 sm:$0xff]
        %827 = vrot.lane.b32.xlu0 %v804, 16
        %v828 = vpop.permute.xlu0 %827
        %829 = vrot.lane.b32.xlu0 %v806, 16
        %v830 = vpop.permute.xlu0 %829
        %831 = vrot.lane.b32.xlu0 %v808, 16
        %v832 = vpop.permute.xlu0 %831
        %833 = vrot.lane.b32.xlu0 %v810, 16
        %v834 = vpop.permute.xlu0 %833
        %835 = vrot.lane.b32.xlu0 %v812, 16
        %v836 = vpop.permute.xlu0 %835
        %837 = vrot.lane.b32.xlu0 %v814, 16
        %v838 = vpop.permute.xlu0 %837
        %839 = vrot.lane.b32.xlu0 %v816, 16
        %v840 = vpop.permute.xlu0 %839
        %841 = vrot.lane.b32.xlu0 %v818, 16
        %v842 = vpop.permute.xlu0 %841
        %vm851 = vcmask 162944
        %852 = vst.msk [vmem:[#allocation4] sm:$0xff] %vm851, %v828
        %853 = vst.msk [vmem:[#allocation4 + $0x8] sm:$0xff] %vm851, %v830
        %854 = vst.msk [vmem:[#allocation4 + $0x10] sm:$0xff] %vm851, %v832
        %855 = vst.msk [vmem:[#allocation4 + $0x18] sm:$0xff] %vm851, %v834
        %856 = vst.msk [vmem:[#allocation4 + $0x20] sm:$0xff] %vm851, %v836
        %857 = vst.msk [vmem:[#allocation4 + $0x28] sm:$0xff] %vm851, %v838
        %858 = vst.msk [vmem:[#allocation4 + $0x30] sm:$0xff] %vm851, %v840
        %859 = vst.msk [vmem:[#allocation4 + $0x38] sm:$0xff] %vm851, %v842
        %s860 = scalar_lea.vmem %s313, 2 [#allocation2]
        %v861 = vld [vmem:[%s860] ss:$2 sm:$0xff]
        %s862 = scalar_lea.vmem %s313, 50 [#allocation2]
        %v863 = vld [vmem:[%s862] ss:$2 sm:$0xff]
        %s864 = scalar_lea.vmem %s313, 98 [#allocation2]
        %v865 = vld [vmem:[%s864] ss:$2 sm:$0xff]
        %s866 = scalar_lea.vmem %s313, 146 [#allocation2]
        %v867 = vld [vmem:[%s866] ss:$2 sm:$0xff]
        %s868 = scalar_lea.vmem %s313, 194 [#allocation2]
        %v869 = vld [vmem:[%s868] ss:$2 sm:$0xff]
        %s870 = scalar_lea.vmem %s313, 242 [#allocation2]
        %v871 = vld [vmem:[%s870] ss:$2 sm:$0xff]
        %s872 = scalar_lea.vmem %s313, 290 [#allocation2]
        %v873 = vld [vmem:[%s872] ss:$2 sm:$0xff]
        %s874 = scalar_lea.vmem %s313, 338 [#allocation2]
        %v875 = vld [vmem:[%s874] ss:$2 sm:$0xff]
        %884 = vrot.lane.b32.xlu0 %v861, 20
        %v885 = vpop.permute.xlu0 %884
        %886 = vrot.lane.b32.xlu0 %v863, 20
        %v887 = vpop.permute.xlu0 %886
        %888 = vrot.lane.b32.xlu0 %v865, 20
        %v889 = vpop.permute.xlu0 %888
        %890 = vrot.lane.b32.xlu0 %v867, 20
        %v891 = vpop.permute.xlu0 %890
        %892 = vrot.lane.b32.xlu0 %v869, 20
        %v893 = vpop.permute.xlu0 %892
        %894 = vrot.lane.b32.xlu0 %v871, 20
        %v895 = vpop.permute.xlu0 %894
        %896 = vrot.lane.b32.xlu0 %v873, 20
        %v897 = vpop.permute.xlu0 %896
        %898 = vrot.lane.b32.xlu0 %v875, 20
        %v899 = vpop.permute.xlu0 %898
        %vm908 = vcmask 195744
        %909 = vst.msk [vmem:[#allocation4] sm:$0xff] %vm908, %v885
        %910 = vst.msk [vmem:[#allocation4 + $0x8] sm:$0xff] %vm908, %v887
        %911 = vst.msk [vmem:[#allocation4 + $0x10] sm:$0xff] %vm908, %v889
        %912 = vst.msk [vmem:[#allocation4 + $0x18] sm:$0xff] %vm908, %v891
        %913 = vst.msk [vmem:[#allocation4 + $0x20] sm:$0xff] %vm908, %v893
        %914 = vst.msk [vmem:[#allocation4 + $0x28] sm:$0xff] %vm908, %v895
        %915 = vst.msk [vmem:[#allocation4 + $0x30] sm:$0xff] %vm908, %v897
        %916 = vst.msk [vmem:[#allocation4 + $0x38] sm:$0xff] %vm908, %v899
        %s917 = scalar_lea.vmem [#allocation2], 48
        %v918 = vld [vmem:[%s917] ss:$2 sm:$0xff]
        %s919 = scalar_lea.vmem %s917, 48 [#allocation2]
        %v920 = vld [vmem:[%s919] ss:$2 sm:$0xff]
        %s921 = scalar_lea.vmem %s917, 96 [#allocation2]
        %v922 = vld [vmem:[%s921] ss:$2 sm:$0xff]
        %s923 = scalar_lea.vmem %s917, 144 [#allocation2]
        %v924 = vld [vmem:[%s923] ss:$2 sm:$0xff]
        %s925 = scalar_lea.vmem %s917, 192 [#allocation2]
        %v926 = vld [vmem:[%s925] ss:$2 sm:$0xff]
        %s927 = scalar_lea.vmem %s917, 240 [#allocation2]
        %v928 = vld [vmem:[%s927] ss:$2 sm:$0xff]
        %s929 = scalar_lea.vmem %s917, 288 [#allocation2]
        %v930 = vld [vmem:[%s929] ss:$2 sm:$0xff]
        %s931 = scalar_lea.vmem %s917, 336 [#allocation2]
        %v932 = vld [vmem:[%s931] ss:$2 sm:$0xff]
        %941 = vrot.lane.b32.xlu0 %v918, 24
        %v942 = vpop.permute.xlu0 %941
        %943 = vrot.lane.b32.xlu0 %v920, 24
        %v944 = vpop.permute.xlu0 %943
        %945 = vrot.lane.b32.xlu0 %v922, 24
        %v946 = vpop.permute.xlu0 %945
        %947 = vrot.lane.b32.xlu0 %v924, 24
        %v948 = vpop.permute.xlu0 %947
        %949 = vrot.lane.b32.xlu0 %v926, 24
        %v950 = vpop.permute.xlu0 %949
        %951 = vrot.lane.b32.xlu0 %v928, 24
        %v952 = vpop.permute.xlu0 %951
        %953 = vrot.lane.b32.xlu0 %v930, 24
        %v954 = vpop.permute.xlu0 %953
        %955 = vrot.lane.b32.xlu0 %v932, 24
        %v956 = vpop.permute.xlu0 %955
        %vm965 = vcmask 228544
        %966 = vst.msk [vmem:[#allocation4] sm:$0xff] %vm965, %v942
        %967 = vst.msk [vmem:[#allocation4 + $0x8] sm:$0xff] %vm965, %v944
        %968 = vst.msk [vmem:[#allocation4 + $0x10] sm:$0xff] %vm965, %v946
        %969 = vst.msk [vmem:[#allocation4 + $0x18] sm:$0xff] %vm965, %v948
        %970 = vst.msk [vmem:[#allocation4 + $0x20] sm:$0xff] %vm965, %v950
        %971 = vst.msk [vmem:[#allocation4 + $0x28] sm:$0xff] %vm965, %v952
        %972 = vst.msk [vmem:[#allocation4 + $0x30] sm:$0xff] %vm965, %v954
        %973 = vst.msk [vmem:[#allocation4 + $0x38] sm:$0xff] %vm965, %v956
        %s974 = scalar_lea.vmem %s917, 1 [#allocation2]
        %v975 = vld [vmem:[%s974] ss:$2 sm:$0xff]
        %s976 = scalar_lea.vmem %s917, 49 [#allocation2]
        %v977 = vld [vmem:[%s976] ss:$2 sm:$0xff]
        %s978 = scalar_lea.vmem %s917, 97 [#allocation2]
        %v979 = vld [vmem:[%s978] ss:$2 sm:$0xff]
        %s980 = scalar_lea.vmem %s917, 145 [#allocation2]
        %v981 = vld [vmem:[%s980] ss:$2 sm:$0xff]
        %s982 = scalar_lea.vmem %s917, 193 [#allocation2]
        %v983 = vld [vmem:[%s982] ss:$2 sm:$0xff]
        %s984 = scalar_lea.vmem %s917, 241 [#allocation2]
        %v985 = vld [vmem:[%s984] ss:$2 sm:$0xff]
        %s986 = scalar_lea.vmem %s917, 289 [#allocation2]
        %v987 = vld [vmem:[%s986] ss:$2 sm:$0xff]
        %s988 = scalar_lea.vmem %s917, 337 [#allocation2]
        %v989 = vld [vmem:[%s988] ss:$2 sm:$0xff]
        %998 = vrot.lane.b32.xlu0 %v975, 28
        %v999 = vpop.permute.xlu0 %998
        %1000 = vrot.lane.b32.xlu0 %v977, 28
        %v1001 = vpop.permute.xlu0 %1000
        %1002 = vrot.lane.b32.xlu0 %v979, 28
        %v1003 = vpop.permute.xlu0 %1002
        %1004 = vrot.lane.b32.xlu0 %v981, 28
        %v1005 = vpop.permute.xlu0 %1004
        %1006 = vrot.lane.b32.xlu0 %v983, 28
        %v1007 = vpop.permute.xlu0 %1006
        %1008 = vrot.lane.b32.xlu0 %v985, 28
        %v1009 = vpop.permute.xlu0 %1008
        %1010 = vrot.lane.b32.xlu0 %v987, 28
        %v1011 = vpop.permute.xlu0 %1010
        %1012 = vrot.lane.b32.xlu0 %v989, 28
        %v1013 = vpop.permute.xlu0 %1012
        %vm1022 = vcmask 261344
        %1023 = vst.msk [vmem:[#allocation4] sm:$0xff] %vm1022, %v999
        %1024 = vst.msk [vmem:[#allocation4 + $0x8] sm:$0xff] %vm1022, %v1001
        %1025 = vst.msk [vmem:[#allocation4 + $0x10] sm:$0xff] %vm1022, %v1003
        %1026 = vst.msk [vmem:[#allocation4 + $0x18] sm:$0xff] %vm1022, %v1005
        %1027 = vst.msk [vmem:[#allocation4 + $0x20] sm:$0xff] %vm1022, %v1007
        %1028 = vst.msk [vmem:[#allocation4 + $0x28] sm:$0xff] %vm1022, %v1009
        %1029 = vst.msk [vmem:[#allocation4 + $0x30] sm:$0xff] %vm1022, %v1011
        %1030 = vst.msk [vmem:[#allocation4 + $0x38] sm:$0xff] %vm1022, %v1013
        %s1031 = scalar_lea.vmem %s917, 2 [#allocation2]
        %v1032 = vld [vmem:[%s1031] ss:$2 sm:$0xff]
        %s1033 = scalar_lea.vmem %s917, 50 [#allocation2]
        %v1034 = vld [vmem:[%s1033] ss:$2 sm:$0xff]
        %s1035 = scalar_lea.vmem %s917, 98 [#allocation2]
        %v1036 = vld [vmem:[%s1035] ss:$2 sm:$0xff]
        %s1037 = scalar_lea.vmem %s917, 146 [#allocation2]
        %v1038 = vld [vmem:[%s1037] ss:$2 sm:$0xff]
        %s1039 = scalar_lea.vmem %s917, 194 [#allocation2]
        %v1040 = vld [vmem:[%s1039] ss:$2 sm:$0xff]
        %s1041 = scalar_lea.vmem %s917, 242 [#allocation2]
        %v1042 = vld [vmem:[%s1041] ss:$2 sm:$0xff]
        %s1043 = scalar_lea.vmem %s917, 290 [#allocation2]
        %v1044 = vld [vmem:[%s1043] ss:$2 sm:$0xff]
        %s1045 = scalar_lea.vmem %s917, 338 [#allocation2]
        %v1046 = vld [vmem:[%s1045] ss:$2 sm:$0xff]
        %1055 = vrot.lane.b32.xlu0 %v1032, 32
        %v1056 = vpop.permute.xlu0 %1055
        %1057 = vrot.lane.b32.xlu0 %v1034, 32
        %v1058 = vpop.permute.xlu0 %1057
        %1059 = vrot.lane.b32.xlu0 %v1036, 32
        %v1060 = vpop.permute.xlu0 %1059
        %1061 = vrot.lane.b32.xlu0 %v1038, 32
        %v1062 = vpop.permute.xlu0 %1061
        %1063 = vrot.lane.b32.xlu0 %v1040, 32
        %v1064 = vpop.permute.xlu0 %1063
        %1065 = vrot.lane.b32.xlu0 %v1042, 32
        %v1066 = vpop.permute.xlu0 %1065
        %1067 = vrot.lane.b32.xlu0 %v1044, 32
        %v1068 = vpop.permute.xlu0 %1067
        %1069 = vrot.lane.b32.xlu0 %v1046, 32
        %v1070 = vpop.permute.xlu0 %1069
        %vm1079 = vcmask 294144
        %1080 = vst.msk [vmem:[#allocation4] sm:$0xff] %vm1079, %v1056
        %1081 = vst.msk [vmem:[#allocation4 + $0x8] sm:$0xff] %vm1079, %v1058
        %1082 = vst.msk [vmem:[#allocation4 + $0x10] sm:$0xff] %vm1079, %v1060
        %1083 = vst.msk [vmem:[#allocation4 + $0x18] sm:$0xff] %vm1079, %v1062
        %1084 = vst.msk [vmem:[#allocation4 + $0x20] sm:$0xff] %vm1079, %v1064
        %1085 = vst.msk [vmem:[#allocation4 + $0x28] sm:$0xff] %vm1079, %v1066
        %1086 = vst.msk [vmem:[#allocation4 + $0x30] sm:$0xff] %vm1079, %v1068
        %1087 = vst.msk [vmem:[#allocation4 + $0x38] sm:$0xff] %vm1079, %v1070
        %v1088 = vld [vmem:[#allocation4] sm:$0xff]
        %v1089 = vld [vmem:[#allocation4 + $0x8] sm:$0xff]
        %v1090 = vld [vmem:[#allocation4 + $0x10] sm:$0xff]
        %v1091 = vld [vmem:[#allocation4 + $0x18] sm:$0xff]
        %v1092 = vld [vmem:[#allocation4 + $0x20] sm:$0xff]
        %v1093 = vld [vmem:[#allocation4 + $0x28] sm:$0xff]
        %v1094 = vld [vmem:[#allocation4 + $0x30] sm:$0xff]
        %v1095 = vld [vmem:[#allocation4 + $0x38] sm:$0xff]
        %v1096 = vld [vmem:[%s1] sm:$0xff]
        %v1097 = vld [vmem:[%s1 + $0x8] sm:$0xff]
        %v1098 = vld [vmem:[%s1 + $0x10] sm:$0xff]
        %v1099 = vld [vmem:[%s1 + $0x18] sm:$0xff]
        %v1100 = vld [vmem:[%s1 + $0x20] sm:$0xf]
        %vm1101 = vcmask 293888
        %v1103 = vsel %vm1101, %v1088, 0
        %v1106 = vsel %vm1101, %v1089, 0
        %v1109 = vsel %vm1101, %v1090, 0
        %v1112 = vsel %vm1101, %v1091, 0
        %v1115 = vsel %vm1101, %v1092, 0
        %v1118 = vsel %vm1101, %v1093, 0
        %v1121 = vsel %vm1101, %v1094, 0
        %v1124 = vsel %vm1101, %v1095, 0
        %vm1126 = vcmask 1043456
        %v1128 = vsel %vm1126, %v1100, 0
        %1130 = vmatprep.subr.mxu0 0.0
        %1131 = vmatpush1.msra.mxu0 %v1096
        %1132 = vmatprep.subr.mxu0 0.0
        %1133 = vmatpush1.msra.mxu0 %v1097
        %1134 = vmatprep.subr.mxu0 0.0
        %1135 = vmatpush1.msra.mxu0 %v1098
        %1136 = vmatprep.subr.mxu0 0.0
        %1137 = vmatpush1.msra.mxu0 %v1099
        %1138 = vmatprep.subr.mxu0 0.0
        %1139 = vmatpush1.msra.mxu0 %v1128
        %1140 = vmatprep.subr.mxu0 0.0
        %1141 = vmatpush1.msra.mxu0 0.0
        %1142 = vmatprep.subr.mxu0 0.0
        %1143 = vmatpush1.msra.mxu0 0.0
        %1144 = vmatprep.subr.mxu0 0.0
        %1145 = vmatpush1.msra.mxu0 0.0
        %1146 = vmatprep.subr.mxu0 0.0
        %1147 = vmatpush1.msra.mxu0 0.0
        %1148 = vmatprep.subr.mxu0 0.0
        %1149 = vmatpush1.msra.mxu0 0.0
        %1150 = vmatprep.subr.mxu0 0.0
        %1151 = vmatpush1.msra.mxu0 0.0
        %1152 = vmatprep.subr.mxu0 0.0
        %1153 = vmatpush1.msra.mxu0 0.0
        %1154 = vmatprep.subr.mxu0 0.0
        %1155 = vmatpush1.msra.mxu0 0.0
        %1156 = vmatprep.subr.mxu0 0.0
        %1157 = vmatpush1.msra.mxu0 0.0
        %1158 = vmatprep.subr.mxu0 0.0
        %1159 = vmatpush1.msra.mxu0 0.0
        %1160 = vmatprep.subr.mxu0 0.0
        %1161 = vmatpush1.msra.mxu0 0.0
        %1162 = vmatprep.subr.mxu0 0.0
        %1163 = vmatpush1.msra.mxu0 0.0
        %1164 = vmatprep.subr.mxu0 0.0
        %1165 = vmatpush1.msra.mxu0 0.0
        %1166 = vmatprep.subr.mxu0 0.0
        %1167 = vmatpush1.msra.mxu0 0.0
        %1168 = vmatprep.subr.mxu0 0.0
        %1169 = vmatpush1.msra.mxu0 0.0
        %1170 = vmatprep.subr.mxu0 0.0
        %1171 = vmatpush1.msra.mxu0 0.0
        %1172 = vmatprep.subr.mxu0 0.0
        %1173 = vmatpush1.msra.mxu0 0.0
        %1174 = vmatprep.subr.mxu0 0.0
        %1175 = vmatpush1.msra.mxu0 0.0
        %1176 = vmatprep.subr.mxu0 0.0
        %1177 = vmatpush1.msra.mxu0 0.0
        %1178 = vmatprep.subr.mxu0 0.0
        %1179 = vmatpush1.msra.mxu0 0.0
        %1180 = vmatprep.subr.mxu0 0.0
        %1181 = vmatpush1.msra.mxu0 0.0
        %1182 = vmatprep.subr.mxu0 0.0
        %1183 = vmatpush1.msra.mxu0 0.0
        %1184 = vmatprep.subr.mxu0 0.0
        %1185 = vmatpush1.msra.mxu0 0.0
        %1186 = vmatprep.subr.mxu0 0.0
        %1187 = vmatpush1.msra.mxu0 0.0
        %1188 = vmatprep.subr.mxu0 0.0
        %1189 = vmatpush1.msra.mxu0 0.0
        %1190 = vmatprep.subr.mxu0 0.0
        %1191 = vmatpush1.msra.mxu0 0.0
        %1192 = vmatprep.subr.mxu0 0.0
        %1193 = vmatpush1.msra.mxu0 0.0
        %1194 = vmatprep.mubr.f32.mxu0 0.0
        %1195 = vmatmul.mubr.f32.gmra.mrb[0].mxu0 %v1103
        %v1196 = vpop.f32.mrb[0].mxu0
        %v1197 = vadd.f32 0.0, %v1196
        %v1198 = vpop.f32.mrb[0].mxu0
        %1199 = vmatprep.mubr.f32.mxu0 0.0
        %1200 = vmatmul.mubr.f32.gmra.mrb[0].mxu0 %v1106
        %v1201 = vpop.f32.mrb[0].mxu0
        %v1202 = vadd.f32 0.0, %v1201
        %v1203 = vpop.f32.mrb[0].mxu0
        %1204 = vmatprep.mubr.f32.mxu0 0.0
        %1205 = vmatmul.mubr.f32.gmra.mrb[0].mxu0 %v1109
        %v1206 = vpop.f32.mrb[0].mxu0
        %v1207 = vadd.f32 0.0, %v1206
        %v1208 = vpop.f32.mrb[0].mxu0
        %1209 = vmatprep.mubr.f32.mxu0 0.0
        %1210 = vmatmul.mubr.f32.gmra.mrb[0].mxu0 %v1112
        %v1211 = vpop.f32.mrb[0].mxu0
        %v1212 = vadd.f32 0.0, %v1211
        %v1213 = vpop.f32.mrb[0].mxu0
        %1214 = vmatprep.mubr.f32.mxu0 0.0
        %1215 = vmatmul.mubr.f32.gmra.mrb[0].mxu0 %v1115
        %v1216 = vpop.f32.mrb[0].mxu0
        %v1217 = vadd.f32 0.0, %v1216
        %v1218 = vpop.f32.mrb[0].mxu0
        %1219 = vmatprep.mubr.f32.mxu0 0.0
        %1220 = vmatmul.mubr.f32.gmra.mrb[0].mxu0 %v1118
        %v1221 = vpop.f32.mrb[0].mxu0
        %v1222 = vadd.f32 0.0, %v1221
        %v1223 = vpop.f32.mrb[0].mxu0
        %1224 = vmatprep.mubr.f32.mxu0 0.0
        %1225 = vmatmul.mubr.f32.gmra.mrb[0].mxu0 %v1121
        %v1226 = vpop.f32.mrb[0].mxu0
        %v1227 = vadd.f32 0.0, %v1226
        %v1228 = vpop.f32.mrb[0].mxu0
        %1229 = vmatprep.mubr.f32.mxu0 0.0
        %1230 = vmatmul.mubr.f32.gmra.mrb[0].mxu0 %v1124
        %v1231 = vpop.f32.mrb[0].mxu0
        %v1232 = vadd.f32 0.0, %v1231
        %v1233 = vpop.f32.mrb[0].mxu0
        %1234 = vdwg.mxu0
        %v1235 = vld [vmem:[%s4] sm:$0x1]
        %v1237 = vlaneseq
        %v1238 = vshrl.u32 %v1237, 7
        %v1239 = vsub.s32 0, %v1238
        %v1240 = vrot.slane %v1235, %v1239
        %v1242 = vmul.f32 %v1197, %v1240
        %v1243 = vmul.f32 %v1202, %v1240
        %v1244 = vmul.f32 %v1207, %v1240
        %v1245 = vmul.f32 %v1212, %v1240
        %v1246 = vmul.f32 %v1217, %v1240
        %v1247 = vmul.f32 %v1222, %v1240
        %v1248 = vmul.f32 %v1227, %v1240
        %v1249 = vmul.f32 %v1232, %v1240
        %v1250 = vld [vmem:[%s5] sm:$0x1]
        %v1252 = vlaneseq
        %v1253 = vshrl.u32 %v1252, 7
        %v1254 = vsub.s32 0, %v1253
        %v1255 = vrot.slane %v1250, %v1254
        %v1257 = vadd.f32 %v1242, %v1255
        %v1258 = vadd.f32 %v1243, %v1255
        %v1259 = vadd.f32 %v1244, %v1255
        %v1260 = vadd.f32 %v1245, %v1255
        %v1261 = vadd.f32 %v1246, %v1255
        %v1262 = vadd.f32 %v1247, %v1255
        %v1263 = vadd.f32 %v1248, %v1255
        %v1264 = vadd.f32 %v1249, %v1255
        %vm1265 = vcmp.ge.f32.partialorder %v1257, 0.0
        %vm1266 = vcmp.ge.f32.partialorder %v1258, 0.0
        %vm1267 = vcmp.ge.f32.partialorder %v1259, 0.0
        %vm1268 = vcmp.ge.f32.partialorder %v1260, 0.0
        %vm1269 = vcmp.ge.f32.partialorder %v1261, 0.0
        %vm1270 = vcmp.ge.f32.partialorder %v1262, 0.0
        %vm1271 = vcmp.ge.f32.partialorder %v1263, 0.0
        %vm1272 = vcmp.ge.f32.partialorder %v1264, 0.0
        %v1273 = vmul.f32 %v1257, 0.01
        %v1274 = vmul.f32 %v1258, 0.01
        %v1275 = vmul.f32 %v1259, 0.01
        %v1276 = vmul.f32 %v1260, 0.01
        %v1277 = vmul.f32 %v1261, 0.01
        %v1278 = vmul.f32 %v1262, 0.01
        %v1279 = vmul.f32 %v1263, 0.01
        %v1280 = vmul.f32 %v1264, 0.01
        %v1281 = vsel %vm1265, %v1257, %v1273
        %v1282 = vsel %vm1266, %v1258, %v1274
        %v1283 = vsel %vm1267, %v1259, %v1275
        %v1284 = vsel %vm1268, %v1260, %v1276
        %v1285 = vsel %vm1269, %v1261, %v1277
        %v1286 = vsel %vm1270, %v1262, %v1278
        %v1287 = vsel %vm1271, %v1263, %v1279
        %v1288 = vsel %vm1272, %v1264, %v1280
        %1289 = vst.msk [vmem:[%s354 + $0x1] sm:$0xff] %vm347, %v1281
        %1290 = vst.msk [vmem:[%s354 + $0x11] sm:$0xff] %vm347, %v1282
        %1291 = vst.msk [vmem:[%s354 + $0x21] sm:$0xff] %vm347, %v1283
        %1292 = vst.msk [vmem:[%s354 + $0x31] sm:$0xff] %vm347, %v1284
        %1293 = vst.msk [vmem:[%s354 + $0x41] sm:$0xff] %vm347, %v1285
        %1294 = vst.msk [vmem:[%s354 + $0x51] sm:$0xff] %vm347, %v1286
        %1295 = vst.msk [vmem:[%s354 + $0x61] sm:$0xff] %vm347, %v1287
        %1296 = vst.msk [vmem:[%s354 + $0x71] sm:$0xff] %vm347, %v1288
        %v1297 = vld [vmem:[#allocation3] sm:$0xff]
        %v1298 = vld [vmem:[#allocation3 + $0x10] sm:$0xff]
        %v1299 = vld [vmem:[#allocation3 + $0x20] sm:$0xff]
        %v1300 = vld [vmem:[#allocation3 + $0x30] sm:$0xff]
        %v1301 = vld [vmem:[#allocation3 + $0x40] sm:$0xff]
        %v1302 = vld [vmem:[#allocation3 + $0x50] sm:$0xff]
        %v1303 = vld [vmem:[#allocation3 + $0x60] sm:$0xff]
        %v1304 = vld [vmem:[#allocation3 + $0x70] sm:$0xff]
        %1305 = vst.msk [vmem:[#allocation5] sm:$0xff] %vm347, %v1297
        %1306 = vst.msk [vmem:[#allocation5 + $0x8] sm:$0xff] %vm347, %v1298
        %1307 = vst.msk [vmem:[#allocation5 + $0x10] sm:$0xff] %vm347, %v1299
        %1308 = vst.msk [vmem:[#allocation5 + $0x18] sm:$0xff] %vm347, %v1300
        %1309 = vst.msk [vmem:[#allocation5 + $0x20] sm:$0xff] %vm347, %v1301
        %1310 = vst.msk [vmem:[#allocation5 + $0x28] sm:$0xff] %vm347, %v1302
        %1311 = vst.msk [vmem:[#allocation5 + $0x30] sm:$0xff] %vm347, %v1303
        %1312 = vst.msk [vmem:[#allocation5 + $0x38] sm:$0xff] %vm347, %v1304
        %v1313 = vld [vmem:[#allocation3 + $0x1] sm:$0xff]
        %v1314 = vld [vmem:[#allocation3 + $0x11] sm:$0xff]
        %v1315 = vld [vmem:[#allocation3 + $0x21] sm:$0xff]
        %v1316 = vld [vmem:[#allocation3 + $0x31] sm:$0xff]
        %v1317 = vld [vmem:[#allocation3 + $0x41] sm:$0xff]
        %v1318 = vld [vmem:[#allocation3 + $0x51] sm:$0xff]
        %v1319 = vld [vmem:[#allocation3 + $0x61] sm:$0xff]
        %v1320 = vld [vmem:[#allocation3 + $0x71] sm:$0xff]
        %1329 = vrot.lane.b32.xlu0 %v1313, 8
        %v1330 = vpop.permute.xlu0 %1329
        %1331 = vrot.lane.b32.xlu0 %v1314, 8
        %v1332 = vpop.permute.xlu0 %1331
        %1333 = vrot.lane.b32.xlu0 %v1315, 8
        %v1334 = vpop.permute.xlu0 %1333
        %1335 = vrot.lane.b32.xlu0 %v1316, 8
        %v1336 = vpop.permute.xlu0 %1335
        %1337 = vrot.lane.b32.xlu0 %v1317, 8
        %v1338 = vpop.permute.xlu0 %1337
        %1339 = vrot.lane.b32.xlu0 %v1318, 8
        %v1340 = vpop.permute.xlu0 %1339
        %1341 = vrot.lane.b32.xlu0 %v1319, 8
        %v1342 = vpop.permute.xlu0 %1341
        %1343 = vrot.lane.b32.xlu0 %v1320, 8
        %v1344 = vpop.permute.xlu0 %1343
        %vm1353 = vcmask 130112
        %1354 = vst.msk [vmem:[#allocation5] sm:$0xff] %vm1353, %v1330
        %1355 = vst.msk [vmem:[#allocation5 + $0x8] sm:$0xff] %vm1353, %v1332
        %1356 = vst.msk [vmem:[#allocation5 + $0x10] sm:$0xff] %vm1353, %v1334
        %1357 = vst.msk [vmem:[#allocation5 + $0x18] sm:$0xff] %vm1353, %v1336
        %1358 = vst.msk [vmem:[#allocation5 + $0x20] sm:$0xff] %vm1353, %v1338
        %1359 = vst.msk [vmem:[#allocation5 + $0x28] sm:$0xff] %vm1353, %v1340
        %1360 = vst.msk [vmem:[#allocation5 + $0x30] sm:$0xff] %vm1353, %v1342
        %1361 = vst.msk [vmem:[#allocation5 + $0x38] sm:$0xff] %vm1353, %v1344
        %v1362 = vld [vmem:[#allocation3 + $0x2] sm:$0xff]
        %v1363 = vld [vmem:[#allocation3 + $0x12] sm:$0xff]
        %v1364 = vld [vmem:[#allocation3 + $0x22] sm:$0xff]
        %v1365 = vld [vmem:[#allocation3 + $0x32] sm:$0xff]
        %v1366 = vld [vmem:[#allocation3 + $0x42] sm:$0xff]
        %v1367 = vld [vmem:[#allocation3 + $0x52] sm:$0xff]
        %v1368 = vld [vmem:[#allocation3 + $0x62] sm:$0xff]
        %v1369 = vld [vmem:[#allocation3 + $0x72] sm:$0xff]
        %1378 = vrot.lane.b32.xlu0 %v1362, 16
        %v1379 = vpop.permute.xlu0 %1378
        %1380 = vrot.lane.b32.xlu0 %v1363, 16
        %v1381 = vpop.permute.xlu0 %1380
        %1382 = vrot.lane.b32.xlu0 %v1364, 16
        %v1383 = vpop.permute.xlu0 %1382
        %1384 = vrot.lane.b32.xlu0 %v1365, 16
        %v1385 = vpop.permute.xlu0 %1384
        %1386 = vrot.lane.b32.xlu0 %v1366, 16
        %v1387 = vpop.permute.xlu0 %1386
        %1388 = vrot.lane.b32.xlu0 %v1367, 16
        %v1389 = vpop.permute.xlu0 %1388
        %1390 = vrot.lane.b32.xlu0 %v1368, 16
        %v1391 = vpop.permute.xlu0 %1390
        %1392 = vrot.lane.b32.xlu0 %v1369, 16
        %v1393 = vpop.permute.xlu0 %1392
        %vm1402 = vcmask 195712
        %1403 = vst.msk [vmem:[#allocation5] sm:$0xff] %vm1402, %v1379
        %1404 = vst.msk [vmem:[#allocation5 + $0x8] sm:$0xff] %vm1402, %v1381
        %1405 = vst.msk [vmem:[#allocation5 + $0x10] sm:$0xff] %vm1402, %v1383
        %1406 = vst.msk [vmem:[#allocation5 + $0x18] sm:$0xff] %vm1402, %v1385
        %1407 = vst.msk [vmem:[#allocation5 + $0x20] sm:$0xff] %vm1402, %v1387
        %1408 = vst.msk [vmem:[#allocation5 + $0x28] sm:$0xff] %vm1402, %v1389
        %1409 = vst.msk [vmem:[#allocation5 + $0x30] sm:$0xff] %vm1402, %v1391
        %1410 = vst.msk [vmem:[#allocation5 + $0x38] sm:$0xff] %vm1402, %v1393
        %v1411 = vld [vmem:[%s354] sm:$0xff]
        %v1412 = vld [vmem:[%s354 + $0x10] sm:$0xff]
        %v1413 = vld [vmem:[%s354 + $0x20] sm:$0xff]
        %v1414 = vld [vmem:[%s354 + $0x30] sm:$0xff]
        %v1415 = vld [vmem:[%s354 + $0x40] sm:$0xff]
        %v1416 = vld [vmem:[%s354 + $0x50] sm:$0xff]
        %v1417 = vld [vmem:[%s354 + $0x60] sm:$0xff]
        %v1418 = vld [vmem:[%s354 + $0x70] sm:$0xff]
        %1427 = vrot.lane.b32.xlu0 %v1411, 24
        %v1428 = vpop.permute.xlu0 %1427
        %1429 = vrot.lane.b32.xlu0 %v1412, 24
        %v1430 = vpop.permute.xlu0 %1429
        %1431 = vrot.lane.b32.xlu0 %v1413, 24
        %v1432 = vpop.permute.xlu0 %1431
        %1433 = vrot.lane.b32.xlu0 %v1414, 24
        %v1434 = vpop.permute.xlu0 %1433
        %1435 = vrot.lane.b32.xlu0 %v1415, 24
        %v1436 = vpop.permute.xlu0 %1435
        %1437 = vrot.lane.b32.xlu0 %v1416, 24
        %v1438 = vpop.permute.xlu0 %1437
        %1439 = vrot.lane.b32.xlu0 %v1417, 24
        %v1440 = vpop.permute.xlu0 %1439
        %1441 = vrot.lane.b32.xlu0 %v1418, 24
        %v1442 = vpop.permute.xlu0 %1441
        %vm1451 = vcmask 261312
        %1452 = vst.msk [vmem:[#allocation5] sm:$0xff] %vm1451, %v1428
        %1453 = vst.msk [vmem:[#allocation5 + $0x8] sm:$0xff] %vm1451, %v1430
        %1454 = vst.msk [vmem:[#allocation5 + $0x10] sm:$0xff] %vm1451, %v1432
        %1455 = vst.msk [vmem:[#allocation5 + $0x18] sm:$0xff] %vm1451, %v1434
        %1456 = vst.msk [vmem:[#allocation5 + $0x20] sm:$0xff] %vm1451, %v1436
        %1457 = vst.msk [vmem:[#allocation5 + $0x28] sm:$0xff] %vm1451, %v1438
        %1458 = vst.msk [vmem:[#allocation5 + $0x30] sm:$0xff] %vm1451, %v1440
        %1459 = vst.msk [vmem:[#allocation5 + $0x38] sm:$0xff] %vm1451, %v1442
        %v1460 = vld [vmem:[%s354 + $0x1] sm:$0xff]
        %v1461 = vld [vmem:[%s354 + $0x11] sm:$0xff]
        %v1462 = vld [vmem:[%s354 + $0x21] sm:$0xff]
        %v1463 = vld [vmem:[%s354 + $0x31] sm:$0xff]
        %v1464 = vld [vmem:[%s354 + $0x41] sm:$0xff]
        %v1465 = vld [vmem:[%s354 + $0x51] sm:$0xff]
        %v1466 = vld [vmem:[%s354 + $0x61] sm:$0xff]
        %v1467 = vld [vmem:[%s354 + $0x71] sm:$0xff]
        %1476 = vrot.lane.b32.xlu0 %v1460, 32
        %v1477 = vpop.permute.xlu0 %1476
        %1478 = vrot.lane.b32.xlu0 %v1461, 32
        %v1479 = vpop.permute.xlu0 %1478
        %1480 = vrot.lane.b32.xlu0 %v1462, 32
        %v1481 = vpop.permute.xlu0 %1480
        %1482 = vrot.lane.b32.xlu0 %v1463, 32
        %v1483 = vpop.permute.xlu0 %1482
        %1484 = vrot.lane.b32.xlu0 %v1464, 32
        %v1485 = vpop.permute.xlu0 %1484
        %1486 = vrot.lane.b32.xlu0 %v1465, 32
        %v1487 = vpop.permute.xlu0 %1486
        %1488 = vrot.lane.b32.xlu0 %v1466, 32
        %v1489 = vpop.permute.xlu0 %1488
        %1490 = vrot.lane.b32.xlu0 %v1467, 32
        %v1491 = vpop.permute.xlu0 %1490
        %vm1500 = vcmask 326912
        %1501 = vst.msk [vmem:[#allocation5] sm:$0xff] %vm1500, %v1477
        %1502 = vst.msk [vmem:[#allocation5 + $0x8] sm:$0xff] %vm1500, %v1479
        %1503 = vst.msk [vmem:[#allocation5 + $0x10] sm:$0xff] %vm1500, %v1481
        %1504 = vst.msk [vmem:[#allocation5 + $0x18] sm:$0xff] %vm1500, %v1483
        %1505 = vst.msk [vmem:[#allocation5 + $0x20] sm:$0xff] %vm1500, %v1485
        %1506 = vst.msk [vmem:[#allocation5 + $0x28] sm:$0xff] %vm1500, %v1487
        %1507 = vst.msk [vmem:[#allocation5 + $0x30] sm:$0xff] %vm1500, %v1489
        %1508 = vst.msk [vmem:[#allocation5 + $0x38] sm:$0xff] %vm1500, %v1491
        %v1509 = vld [vmem:[%s354 + $0x2] sm:$0xff]
        %v1510 = vld [vmem:[%s354 + $0x12] sm:$0xff]
        %v1511 = vld [vmem:[%s354 + $0x22] sm:$0xff]
        %v1512 = vld [vmem:[%s354 + $0x32] sm:$0xff]
        %v1513 = vld [vmem:[%s354 + $0x42] sm:$0xff]
        %v1514 = vld [vmem:[%s354 + $0x52] sm:$0xff]
        %v1515 = vld [vmem:[%s354 + $0x62] sm:$0xff]
        %v1516 = vld [vmem:[%s354 + $0x72] sm:$0xff]
        %1525 = vrot.lane.b32.xlu0 %v1509, 40
        %v1526 = vpop.permute.xlu0 %1525
        %1527 = vrot.lane.b32.xlu0 %v1510, 40
        %v1528 = vpop.permute.xlu0 %1527
        %1529 = vrot.lane.b32.xlu0 %v1511, 40
        %v1530 = vpop.permute.xlu0 %1529
        %1531 = vrot.lane.b32.xlu0 %v1512, 40
        %v1532 = vpop.permute.xlu0 %1531
        %1533 = vrot.lane.b32.xlu0 %v1513, 40
        %v1534 = vpop.permute.xlu0 %1533
        %1535 = vrot.lane.b32.xlu0 %v1514, 40
        %v1536 = vpop.permute.xlu0 %1535
        %1537 = vrot.lane.b32.xlu0 %v1515, 40
        %v1538 = vpop.permute.xlu0 %1537
        %1539 = vrot.lane.b32.xlu0 %v1516, 40
        %v1540 = vpop.permute.xlu0 %1539
        %vm1549 = vcmask 392512
        %1550 = vst.msk [vmem:[#allocation5] sm:$0xff] %vm1549, %v1526
        %1551 = vst.msk [vmem:[#allocation5 + $0x8] sm:$0xff] %vm1549, %v1528
        %1552 = vst.msk [vmem:[#allocation5 + $0x10] sm:$0xff] %vm1549, %v1530
        %1553 = vst.msk [vmem:[#allocation5 + $0x18] sm:$0xff] %vm1549, %v1532
        %1554 = vst.msk [vmem:[#allocation5 + $0x20] sm:$0xff] %vm1549, %v1534
        %1555 = vst.msk [vmem:[#allocation5 + $0x28] sm:$0xff] %vm1549, %v1536
        %1556 = vst.msk [vmem:[#allocation5 + $0x30] sm:$0xff] %vm1549, %v1538
        %1557 = vst.msk [vmem:[#allocation5 + $0x38] sm:$0xff] %vm1549, %v1540
        %s1558 = scalar_lea.vmem [#allocation3], 32
        %v1559 = vld [vmem:[%s1558] sm:$0xff]
        %v1560 = vld [vmem:[%s1558 + $0x10] sm:$0xff]
        %v1561 = vld [vmem:[%s1558 + $0x20] sm:$0xff]
        %v1562 = vld [vmem:[%s1558 + $0x30] sm:$0xff]
        %v1563 = vld [vmem:[%s1558 + $0x40] sm:$0xff]
        %v1564 = vld [vmem:[%s1558 + $0x50] sm:$0xff]
        %v1565 = vld [vmem:[%s1558 + $0x60] sm:$0xff]
        %v1566 = vld [vmem:[%s1558 + $0x70] sm:$0xff]
        %1575 = vrot.lane.b32.xlu0 %v1559, 48
        %v1576 = vpop.permute.xlu0 %1575
        %1577 = vrot.lane.b32.xlu0 %v1560, 48
        %v1578 = vpop.permute.xlu0 %1577
        %1579 = vrot.lane.b32.xlu0 %v1561, 48
        %v1580 = vpop.permute.xlu0 %1579
        %1581 = vrot.lane.b32.xlu0 %v1562, 48
        %v1582 = vpop.permute.xlu0 %1581
        %1583 = vrot.lane.b32.xlu0 %v1563, 48
        %v1584 = vpop.permute.xlu0 %1583
        %1585 = vrot.lane.b32.xlu0 %v1564, 48
        %v1586 = vpop.permute.xlu0 %1585
        %1587 = vrot.lane.b32.xlu0 %v1565, 48
        %v1588 = vpop.permute.xlu0 %1587
        %1589 = vrot.lane.b32.xlu0 %v1566, 48
        %v1590 = vpop.permute.xlu0 %1589
        %vm1599 = vcmask 458112
        %1600 = vst.msk [vmem:[#allocation5] sm:$0xff] %vm1599, %v1576
        %1601 = vst.msk [vmem:[#allocation5 + $0x8] sm:$0xff] %vm1599, %v1578
        %1602 = vst.msk [vmem:[#allocation5 + $0x10] sm:$0xff] %vm1599, %v1580
        %1603 = vst.msk [vmem:[#allocation5 + $0x18] sm:$0xff] %vm1599, %v1582
        %1604 = vst.msk [vmem:[#allocation5 + $0x20] sm:$0xff] %vm1599, %v1584
        %1605 = vst.msk [vmem:[#allocation5 + $0x28] sm:$0xff] %vm1599, %v1586
        %1606 = vst.msk [vmem:[#allocation5 + $0x30] sm:$0xff] %vm1599, %v1588
        %1607 = vst.msk [vmem:[#allocation5 + $0x38] sm:$0xff] %vm1599, %v1590
        %v1608 = vld [vmem:[%s1558 + $0x1] sm:$0xff]
        %v1609 = vld [vmem:[%s1558 + $0x11] sm:$0xff]
        %v1610 = vld [vmem:[%s1558 + $0x21] sm:$0xff]
        %v1611 = vld [vmem:[%s1558 + $0x31] sm:$0xff]
        %v1612 = vld [vmem:[%s1558 + $0x41] sm:$0xff]
        %v1613 = vld [vmem:[%s1558 + $0x51] sm:$0xff]
        %v1614 = vld [vmem:[%s1558 + $0x61] sm:$0xff]
        %v1615 = vld [vmem:[%s1558 + $0x71] sm:$0xff]
        %1624 = vrot.lane.b32.xlu0 %v1608, 56
        %v1625 = vpop.permute.xlu0 %1624
        %1626 = vrot.lane.b32.xlu0 %v1609, 56
        %v1627 = vpop.permute.xlu0 %1626
        %1628 = vrot.lane.b32.xlu0 %v1610, 56
        %v1629 = vpop.permute.xlu0 %1628
        %1630 = vrot.lane.b32.xlu0 %v1611, 56
        %v1631 = vpop.permute.xlu0 %1630
        %1632 = vrot.lane.b32.xlu0 %v1612, 56
        %v1633 = vpop.permute.xlu0 %1632
        %1634 = vrot.lane.b32.xlu0 %v1613, 56
        %v1635 = vpop.permute.xlu0 %1634
        %1636 = vrot.lane.b32.xlu0 %v1614, 56
        %v1637 = vpop.permute.xlu0 %1636
        %1638 = vrot.lane.b32.xlu0 %v1615, 56
        %v1639 = vpop.permute.xlu0 %1638
        %vm1648 = vcmask 523712
        %1649 = vst.msk [vmem:[#allocation5] sm:$0xff] %vm1648, %v1625
        %1650 = vst.msk [vmem:[#allocation5 + $0x8] sm:$0xff] %vm1648, %v1627
        %1651 = vst.msk [vmem:[#allocation5 + $0x10] sm:$0xff] %vm1648, %v1629
        %1652 = vst.msk [vmem:[#allocation5 + $0x18] sm:$0xff] %vm1648, %v1631
        %1653 = vst.msk [vmem:[#allocation5 + $0x20] sm:$0xff] %vm1648, %v1633
        %1654 = vst.msk [vmem:[#allocation5 + $0x28] sm:$0xff] %vm1648, %v1635
        %1655 = vst.msk [vmem:[#allocation5 + $0x30] sm:$0xff] %vm1648, %v1637
        %1656 = vst.msk [vmem:[#allocation5 + $0x38] sm:$0xff] %vm1648, %v1639
        %v1657 = vld [vmem:[%s1558 + $0x2] sm:$0xff]
        %v1658 = vld [vmem:[%s1558 + $0x12] sm:$0xff]
        %v1659 = vld [vmem:[%s1558 + $0x22] sm:$0xff]
        %v1660 = vld [vmem:[%s1558 + $0x32] sm:$0xff]
        %v1661 = vld [vmem:[%s1558 + $0x42] sm:$0xff]
        %v1662 = vld [vmem:[%s1558 + $0x52] sm:$0xff]
        %v1663 = vld [vmem:[%s1558 + $0x62] sm:$0xff]
        %v1664 = vld [vmem:[%s1558 + $0x72] sm:$0xff]
        %1673 = vrot.lane.b32.xlu0 %v1657, 64
        %v1674 = vpop.permute.xlu0 %1673
        %1675 = vrot.lane.b32.xlu0 %v1658, 64
        %v1676 = vpop.permute.xlu0 %1675
        %1677 = vrot.lane.b32.xlu0 %v1659, 64
        %v1678 = vpop.permute.xlu0 %1677
        %1679 = vrot.lane.b32.xlu0 %v1660, 64
        %v1680 = vpop.permute.xlu0 %1679
        %1681 = vrot.lane.b32.xlu0 %v1661, 64
        %v1682 = vpop.permute.xlu0 %1681
        %1683 = vrot.lane.b32.xlu0 %v1662, 64
        %v1684 = vpop.permute.xlu0 %1683
        %1685 = vrot.lane.b32.xlu0 %v1663, 64
        %v1686 = vpop.permute.xlu0 %1685
        %1687 = vrot.lane.b32.xlu0 %v1664, 64
        %v1688 = vpop.permute.xlu0 %1687
        %vm1697 = vcmask 589312
        %1698 = vst.msk [vmem:[#allocation5] sm:$0xff] %vm1697, %v1674
        %1699 = vst.msk [vmem:[#allocation5 + $0x8] sm:$0xff] %vm1697, %v1676
        %1700 = vst.msk [vmem:[#allocation5 + $0x10] sm:$0xff] %vm1697, %v1678
        %1701 = vst.msk [vmem:[#allocation5 + $0x18] sm:$0xff] %vm1697, %v1680
        %1702 = vst.msk [vmem:[#allocation5 + $0x20] sm:$0xff] %vm1697, %v1682
        %1703 = vst.msk [vmem:[#allocation5 + $0x28] sm:$0xff] %vm1697, %v1684
        %1704 = vst.msk [vmem:[#allocation5 + $0x30] sm:$0xff] %vm1697, %v1686
        %1705 = vst.msk [vmem:[#allocation5 + $0x38] sm:$0xff] %vm1697, %v1688
        %v1706 = vld [vmem:[#allocation5] sm:$0xff]
        %v1707 = vld [vmem:[#allocation5 + $0x8] sm:$0xff]
        %v1708 = vld [vmem:[#allocation5 + $0x10] sm:$0xff]
        %v1709 = vld [vmem:[#allocation5 + $0x18] sm:$0xff]
        %v1710 = vld [vmem:[#allocation5 + $0x20] sm:$0xff]
        %v1711 = vld [vmem:[#allocation5 + $0x28] sm:$0xff]
        %v1712 = vld [vmem:[#allocation5 + $0x30] sm:$0xff]
        %v1713 = vld [vmem:[#allocation5 + $0x38] sm:$0xff]
        %v1714 = vld [vmem:[%s6] sm:$0xff]
        %v1715 = vld [vmem:[%s6 + $0x8] sm:$0xff]
        %v1716 = vld [vmem:[%s6 + $0x10] sm:$0xff]
        %v1717 = vld [vmem:[%s6 + $0x18] sm:$0xff]
        %v1718 = vld [vmem:[%s6 + $0x20] sm:$0xff]
        %v1719 = vld [vmem:[%s6 + $0x28] sm:$0xff]
        %v1720 = vld [vmem:[%s6 + $0x30] sm:$0xff]
        %v1721 = vld [vmem:[%s6 + $0x38] sm:$0xff]
        %v1722 = vld [vmem:[%s6 + $0x40] sm:$0xff]
        %vm1723 = vcmask 588800
        %v1725 = vsel %vm1723, %v1706, 0
        %v1728 = vsel %vm1723, %v1707, 0
        %v1731 = vsel %vm1723, %v1708, 0
        %v1734 = vsel %vm1723, %v1709, 0
        %v1737 = vsel %vm1723, %v1710, 0
        %v1740 = vsel %vm1723, %v1711, 0
        %v1743 = vsel %vm1723, %v1712, 0
        %v1746 = vsel %vm1723, %v1713, 0
        %1748 = vmatprep.subr.mxu0 0.0
        %1749 = vmatpush1.msra.mxu0 %v1714
        %1750 = vmatprep.subr.mxu0 0.0
        %1751 = vmatpush1.msra.mxu0 %v1715
        %1752 = vmatprep.subr.mxu0 0.0
        %1753 = vmatpush1.msra.mxu0 %v1716
        %1754 = vmatprep.subr.mxu0 0.0
        %1755 = vmatpush1.msra.mxu0 %v1717
        %1756 = vmatprep.subr.mxu0 0.0
        %1757 = vmatpush1.msra.mxu0 %v1718
        %1758 = vmatprep.subr.mxu0 0.0
        %1759 = vmatpush1.msra.mxu0 %v1719
        %1760 = vmatprep.subr.mxu0 0.0
        %1761 = vmatpush1.msra.mxu0 %v1720
        %1762 = vmatprep.subr.mxu0 0.0
        %1763 = vmatpush1.msra.mxu0 %v1721
        %1764 = vmatprep.subr.mxu0 0.0
        %1765 = vmatpush1.msra.mxu0 %v1722
        %1766 = vmatprep.subr.mxu0 0.0
        %1767 = vmatpush1.msra.mxu0 0.0
        %1768 = vmatprep.subr.mxu0 0.0
        %1769 = vmatpush1.msra.mxu0 0.0
        %1770 = vmatprep.subr.mxu0 0.0
        %1771 = vmatpush1.msra.mxu0 0.0
        %1772 = vmatprep.subr.mxu0 0.0
        %1773 = vmatpush1.msra.mxu0 0.0
        %1774 = vmatprep.subr.mxu0 0.0
        %1775 = vmatpush1.msra.mxu0 0.0
        %1776 = vmatprep.subr.mxu0 0.0
        %1777 = vmatpush1.msra.mxu0 0.0
        %1778 = vmatprep.subr.mxu0 0.0
        %1779 = vmatpush1.msra.mxu0 0.0
        %1780 = vmatprep.subr.mxu0 0.0
        %1781 = vmatpush1.msra.mxu0 0.0
        %1782 = vmatprep.subr.mxu0 0.0
        %1783 = vmatpush1.msra.mxu0 0.0
        %1784 = vmatprep.subr.mxu0 0.0
        %1785 = vmatpush1.msra.mxu0 0.0
        %1786 = vmatprep.subr.mxu0 0.0
        %1787 = vmatpush1.msra.mxu0 0.0
        %1788 = vmatprep.subr.mxu0 0.0
        %1789 = vmatpush1.msra.mxu0 0.0
        %1790 = vmatprep.subr.mxu0 0.0
        %1791 = vmatpush1.msra.mxu0 0.0
        %1792 = vmatprep.subr.mxu0 0.0
        %1793 = vmatpush1.msra.mxu0 0.0
        %1794 = vmatprep.subr.mxu0 0.0
        %1795 = vmatpush1.msra.mxu0 0.0
        %1796 = vmatprep.subr.mxu0 0.0
        %1797 = vmatpush1.msra.mxu0 0.0
        %1798 = vmatprep.subr.mxu0 0.0
        %1799 = vmatpush1.msra.mxu0 0.0
        %1800 = vmatprep.subr.mxu0 0.0
        %1801 = vmatpush1.msra.mxu0 0.0
        %1802 = vmatprep.subr.mxu0 0.0
        %1803 = vmatpush1.msra.mxu0 0.0
        %1804 = vmatprep.subr.mxu0 0.0
        %1805 = vmatpush1.msra.mxu0 0.0
        %1806 = vmatprep.subr.mxu0 0.0
        %1807 = vmatpush1.msra.mxu0 0.0
        %1808 = vmatprep.subr.mxu0 0.0
        %1809 = vmatpush1.msra.mxu0 0.0
        %1810 = vmatprep.subr.mxu0 0.0
        %1811 = vmatpush1.msra.mxu0 0.0
        %1812 = vmatprep.mubr.f32.mxu0 0.0
        %1813 = vmatmul.mubr.f32.gmra.mrb[0].mxu0 %v1725
        %v1814 = vpop.f32.mrb[0].mxu0
        %v1815 = vadd.f32 0.0, %v1814
        %v1816 = vpop.f32.mrb[0].mxu0
        %1817 = vmatprep.mubr.f32.mxu0 0.0
        %1818 = vmatmul.mubr.f32.gmra.mrb[0].mxu0 %v1728
        %v1819 = vpop.f32.mrb[0].mxu0
        %v1820 = vadd.f32 0.0, %v1819
        %v1821 = vpop.f32.mrb[0].mxu0
        %1822 = vmatprep.mubr.f32.mxu0 0.0
        %1823 = vmatmul.mubr.f32.gmra.mrb[0].mxu0 %v1731
        %v1824 = vpop.f32.mrb[0].mxu0
        %v1825 = vadd.f32 0.0, %v1824
        %v1826 = vpop.f32.mrb[0].mxu0
        %1827 = vmatprep.mubr.f32.mxu0 0.0
        %1828 = vmatmul.mubr.f32.gmra.mrb[0].mxu0 %v1734
        %v1829 = vpop.f32.mrb[0].mxu0
        %v1830 = vadd.f32 0.0, %v1829
        %v1831 = vpop.f32.mrb[0].mxu0
        %1832 = vmatprep.mubr.f32.mxu0 0.0
        %1833 = vmatmul.mubr.f32.gmra.mrb[0].mxu0 %v1737
        %v1834 = vpop.f32.mrb[0].mxu0
        %v1835 = vadd.f32 0.0, %v1834
        %v1836 = vpop.f32.mrb[0].mxu0
        %1837 = vmatprep.mubr.f32.mxu0 0.0
        %1838 = vmatmul.mubr.f32.gmra.mrb[0].mxu0 %v1740
        %v1839 = vpop.f32.mrb[0].mxu0
        %v1840 = vadd.f32 0.0, %v1839
        %v1841 = vpop.f32.mrb[0].mxu0
        %1842 = vmatprep.mubr.f32.mxu0 0.0
        %1843 = vmatmul.mubr.f32.gmra.mrb[0].mxu0 %v1743
        %v1844 = vpop.f32.mrb[0].mxu0
        %v1845 = vadd.f32 0.0, %v1844
        %v1846 = vpop.f32.mrb[0].mxu0
        %1847 = vmatprep.mubr.f32.mxu0 0.0
        %1848 = vmatmul.mubr.f32.gmra.mrb[0].mxu0 %v1746
        %v1849 = vpop.f32.mrb[0].mxu0
        %v1850 = vadd.f32 0.0, %v1849
        %v1851 = vpop.f32.mrb[0].mxu0
        %1852 = vdwg.mxu0
        %v1853 = vld [vmem:[%s803] ss:$2 sm:$0xff]
        %v1854 = vld [vmem:[%s805] ss:$2 sm:$0xff]
        %v1855 = vld [vmem:[%s807] ss:$2 sm:$0xff]
        %v1856 = vld [vmem:[%s809] ss:$2 sm:$0xff]
        %v1857 = vld [vmem:[%s811] ss:$2 sm:$0xff]
        %v1858 = vld [vmem:[%s813] ss:$2 sm:$0xff]
        %v1859 = vld [vmem:[%s815] ss:$2 sm:$0xff]
        %v1860 = vld [vmem:[%s817] ss:$2 sm:$0xff]
        %v1861 = vld [vmem:[%s7] sm:$0xf]
        %v1863 = vsel %vm304, %v1853, 0
        %v1866 = vsel %vm304, %v1854, 0
        %v1869 = vsel %vm304, %v1855, 0
        %v1872 = vsel %vm304, %v1856, 0
        %v1875 = vsel %vm304, %v1857, 0
        %v1878 = vsel %vm304, %v1858, 0
        %v1881 = vsel %vm304, %v1859, 0
        %v1884 = vsel %vm304, %v1860, 0
        %v1887 = vsel %vm1126, %v1861, 0
        %1889 = vmatprep.subr.mxu0 0.0
        %1890 = vmatpush1.msra.mxu0 %v1887
        %1891 = vmatprep.subr.mxu0 0.0
        %1892 = vmatpush1.msra.mxu0 0.0
        %1893 = vmatprep.subr.mxu0 0.0
        %1894 = vmatpush1.msra.mxu0 0.0
        %1895 = vmatprep.subr.mxu0 0.0
        %1896 = vmatpush1.msra.mxu0 0.0
        %1897 = vmatprep.subr.mxu0 0.0
        %1898 = vmatpush1.msra.mxu0 0.0
        %1899 = vmatprep.subr.mxu0 0.0
        %1900 = vmatpush1.msra.mxu0 0.0
        %1901 = vmatprep.subr.mxu0 0.0
        %1902 = vmatpush1.msra.mxu0 0.0
        %1903 = vmatprep.subr.mxu0 0.0
        %1904 = vmatpush1.msra.mxu0 0.0
        %1905 = vmatprep.subr.mxu0 0.0
        %1906 = vmatpush1.msra.mxu0 0.0
        %1907 = vmatprep.subr.mxu0 0.0
        %1908 = vmatpush1.msra.mxu0 0.0
        %1909 = vmatprep.subr.mxu0 0.0
        %1910 = vmatpush1.msra.mxu0 0.0
        %1911 = vmatprep.subr.mxu0 0.0
        %1912 = vmatpush1.msra.mxu0 0.0
        %1913 = vmatprep.subr.mxu0 0.0
        %1914 = vmatpush1.msra.mxu0 0.0
        %1915 = vmatprep.subr.mxu0 0.0
        %1916 = vmatpush1.msra.mxu0 0.0
        %1917 = vmatprep.subr.mxu0 0.0
        %1918 = vmatpush1.msra.mxu0 0.0
        %1919 = vmatprep.subr.mxu0 0.0
        %1920 = vmatpush1.msra.mxu0 0.0
        %1921 = vmatprep.subr.mxu0 0.0
        %1922 = vmatpush1.msra.mxu0 0.0
        %1923 = vmatprep.subr.mxu0 0.0
        %1924 = vmatpush1.msra.mxu0 0.0
        %1925 = vmatprep.subr.mxu0 0.0
        %1926 = vmatpush1.msra.mxu0 0.0
        %1927 = vmatprep.subr.mxu0 0.0
        %1928 = vmatpush1.msra.mxu0 0.0
        %1929 = vmatprep.subr.mxu0 0.0
        %1930 = vmatpush1.msra.mxu0 0.0
        %1931 = vmatprep.subr.mxu0 0.0
        %1932 = vmatpush1.msra.mxu0 0.0
        %1933 = vmatprep.subr.mxu0 0.0
        %1934 = vmatpush1.msra.mxu0 0.0
        %1935 = vmatprep.subr.mxu0 0.0
        %1936 = vmatpush1.msra.mxu0 0.0
        %1937 = vmatprep.subr.mxu0 0.0
        %1938 = vmatpush1.msra.mxu0 0.0
        %1939 = vmatprep.subr.mxu0 0.0
        %1940 = vmatpush1.msra.mxu0 0.0
        %1941 = vmatprep.subr.mxu0 0.0
        %1942 = vmatpush1.msra.mxu0 0.0
        %1943 = vmatprep.subr.mxu0 0.0
        %1944 = vmatpush1.msra.mxu0 0.0
        %1945 = vmatprep.subr.mxu0 0.0
        %1946 = vmatpush1.msra.mxu0 0.0
        %1947 = vmatprep.subr.mxu0 0.0
        %1948 = vmatpush1.msra.mxu0 0.0
        %1949 = vmatprep.subr.mxu0 0.0
        %1950 = vmatpush1.msra.mxu0 0.0
        %1951 = vmatprep.subr.mxu0 0.0
        %1952 = vmatpush1.msra.mxu0 0.0
        %1953 = vmatprep.mubr.f32.mxu0 0.0
        %1954 = vmatmul.mubr.f32.gmra.mrb[0].mxu0 %v1863
        %v1955 = vpop.f32.mrb[0].mxu0
        %v1956 = vadd.f32 0.0, %v1955
        %v1957 = vpop.f32.mrb[0].mxu0
        %1958 = vmatprep.mubr.f32.mxu0 0.0
        %1959 = vmatmul.mubr.f32.gmra.mrb[0].mxu0 %v1866
        %v1960 = vpop.f32.mrb[0].mxu0
        %v1961 = vadd.f32 0.0, %v1960
        %v1962 = vpop.f32.mrb[0].mxu0
        %1963 = vmatprep.mubr.f32.mxu0 0.0
        %1964 = vmatmul.mubr.f32.gmra.mrb[0].mxu0 %v1869
        %v1965 = vpop.f32.mrb[0].mxu0
        %v1966 = vadd.f32 0.0, %v1965
        %v1967 = vpop.f32.mrb[0].mxu0
        %1968 = vmatprep.mubr.f32.mxu0 0.0
        %1969 = vmatmul.mubr.f32.gmra.mrb[0].mxu0 %v1872
        %v1970 = vpop.f32.mrb[0].mxu0
        %v1971 = vadd.f32 0.0, %v1970
        %v1972 = vpop.f32.mrb[0].mxu0
        %1973 = vmatprep.mubr.f32.mxu0 0.0
        %1974 = vmatmul.mubr.f32.gmra.mrb[0].mxu0 %v1875
        %v1975 = vpop.f32.mrb[0].mxu0
        %v1976 = vadd.f32 0.0, %v1975
        %v1977 = vpop.f32.mrb[0].mxu0
        %1978 = vmatprep.mubr.f32.mxu0 0.0
        %1979 = vmatmul.mubr.f32.gmra.mrb[0].mxu0 %v1878
        %v1980 = vpop.f32.mrb[0].mxu0
        %v1981 = vadd.f32 0.0, %v1980
        %v1982 = vpop.f32.mrb[0].mxu0
        %1983 = vmatprep.mubr.f32.mxu0 0.0
        %1984 = vmatmul.mubr.f32.gmra.mrb[0].mxu0 %v1881
        %v1985 = vpop.f32.mrb[0].mxu0
        %v1986 = vadd.f32 0.0, %v1985
        %v1987 = vpop.f32.mrb[0].mxu0
        %1988 = vmatprep.mubr.f32.mxu0 0.0
        %1989 = vmatmul.mubr.f32.gmra.mrb[0].mxu0 %v1884
        %v1990 = vpop.f32.mrb[0].mxu0
        %v1991 = vadd.f32 0.0, %v1990
        %v1992 = vpop.f32.mrb[0].mxu0
        %1993 = vdwg.mxu0
        %v1994 = vadd.f32 %v1815, %v1956
        %v1995 = vadd.f32 %v1820, %v1961
        %v1996 = vadd.f32 %v1825, %v1966
        %v1997 = vadd.f32 %v1830, %v1971
        %v1998 = vadd.f32 %v1835, %v1976
        %v1999 = vadd.f32 %v1840, %v1981
        %v2000 = vadd.f32 %v1845, %v1986
        %v2001 = vadd.f32 %v1850, %v1991
        %2002 = vst.msk [vmem:[%s298] sm:$0xff] %vm347, %v1994
        %2003 = vst.msk [vmem:[%s298 + $0x8] sm:$0xff] %vm347, %v1995
        %2004 = vst.msk [vmem:[%s298 + $0x10] sm:$0xff] %vm347, %v1996
        %2005 = vst.msk [vmem:[%s298 + $0x18] sm:$0xff] %vm347, %v1997
        %2006 = vst.msk [vmem:[%s298 + $0x20] sm:$0xff] %vm347, %v1998
        %2007 = vst.msk [vmem:[%s298 + $0x28] sm:$0xff] %vm347, %v1999
        %2008 = vst.msk [vmem:[%s298 + $0x30] sm:$0xff] %vm347, %v2000
        %2009 = vst.msk [vmem:[%s298 + $0x38] sm:$0xff] %vm347, %v2001
        %s2010 = sand.u32 %s203, 1
        %s2011 = scalar_lea.sflag [#allocation7], %s2010
        %s2012 = sand.u32 %s203, 1
        %s2013 = smul.addr %s2012, 64
        %s2014 = scalar_lea.vmem [#allocation6], %s2013
        // Predicated region
        $region53: #{tpu_custom_call.1} parent=51 // pred_check
          %p2015 = pneg %p213
        $region54: #{tpu_custom_call.1} parent=51 // pred_check_branch
          %2017 = sbr.rel (%p2015) target = $region56
        $region55: #{tpu_custom_call.1} parent=51 // pred_region
          %s2019 = ssub.s32 1024, 1024
          %2020 = vsyncadd %s2011, %s2019
          %s2021 = smul.addr %s22, 8
          %s2022 = smul.addr %s2021, 128
          %s2023 = scalar_lea.hbm %s8, %s2022
          %s2024 = sshll.u32 %s2014, 4
          %s2025 = int_to_ptr.vmem [resolvable:$true] %s2024
          %2030 = dma.vmem_to_hbm [thread:$0]  %s2025, 1024, %s2023, %s2011, 128, 128, 8
        $region56: #{tpu_custom_call.1} parent=51 // pred_fallthru
          _
      $region52: #{tpu_custom_call.1} parent=5 // pred_fallthru
        _
      %p2031 = scmp.le.s32.totalorder 2, %s17
      // Predicated region
      $region57: #{tpu_custom_call.1} parent=5 // pred_check
        %p2032 = pneg %p2031
      $region58: #{tpu_custom_call.1} parent=5 // pred_check_branch
        %2034 = sbr.rel (%p2032) target = $region60
      $region59: #{tpu_custom_call.1} parent=5 // pred_region
        %s2035 = ssub.s32 %s17, 2
        // Predicated region
        $region61: #{tpu_custom_call.1} parent=59 // pred_check
          %p2036 = pneg %p219
        $region62: #{tpu_custom_call.1} parent=59 // pred_check_branch
          %2038 = sbr.rel (%p2036) target = $region64
        $region63: #{tpu_custom_call.1} parent=59 // pred_region
          %s2039 = sand.u32 %s204, 1
          %s2040 = scalar_lea.sflag [#allocation7], %s2039
          %s2041 = sand.u32 %s204, 1
          %s2042 = smul.addr %s2041, 64
          %s2043 = scalar_lea.vmem [#allocation6], %s2042
          %2044 = dma.done %s2040, 1024
        $region64: #{tpu_custom_call.1} parent=59 // pred_fallthru
          _
      $region60: #{tpu_custom_call.1} parent=5 // pred_fallthru
        _
    $region6: #{tpu_custom_call.1} parent=1 // loop_footer
      %s21 = sadd.s32 1, %s17
    $region7: #{tpu_custom_call.1} parent=1 // loop_footer_branch
      %16 = sbr.rel target = $region3
    $region8: #{tpu_custom_call.1} parent=1 // loop_exit
      _
    %2045 = vsyncpa [#allocation7], 1
    %s2046 = scalar_lea.sflag [#allocation7], 1
    %2047 = vsyncpa %s2046, 1

</llo_original>
